<compile_context>
chip_gen: v7x
topology: tpu7x:2x2x1
jax: 0.10.0
libtpu: 0.0.40
codegen_flags: <defaults>
</compile_context>

<pallas_src>
import functools

import jax
import jax.numpy as jnp
from jax.experimental import pallas as pl
from jax.experimental.pallas import tpu as pltpu

_EPS = 1e-5                       # nn.LayerNorm default (Python float -> literal)
_INV_SQRT2 = 0.7071067811865476   # Python float, NOT a jnp array (no const capture)
_NEG_BIG = -1e30                  # finite: fully-masked rows give uniform attn, not NaN


def _layernorm(v, gamma, beta):
    mu = jnp.mean(v, axis=-1, keepdims=True)
    var = jnp.mean((v - mu) * (v - mu), axis=-1, keepdims=True)
    return (v - mu) * jax.lax.rsqrt(var + _EPS) * gamma + beta


def transformer_block_kernel(
    x_ref, mask_ref,
    ln1_g_ref, ln1_b_ref,
    wq_ref, wk_ref, wv_ref,
    qn_g_ref, qn_b_ref, kn_g_ref, kn_b_ref,
    proj_w_ref, proj_b_ref,
    ln2_g_ref, ln2_b_ref,
    fc1_w_ref, fc1_b_ref, fc2_w_ref, fc2_b_ref,
    o_ref,
    k_scr, v_scr,
    *, num_heads: int, q_tile: int,
):
    qt = pl.program_id(1)
    S, D = x_ref.shape
    H = num_heads
    TQ = q_tile

    # ---- K / V for this batch element: computed once per batch element ----
    @pl.when(qt == 0)
    def _():
        hx = _layernorm(x_ref[...].astype(jnp.float32),
                        ln1_g_ref[...], ln1_b_ref[...])            # (S, D) f32
        hx16 = hx.astype(jnp.bfloat16)
        kg, kb = kn_g_ref[...], kn_b_ref[...]

        def kv_head(hh, carry):
            k_h = jnp.dot(hx16, wk_ref[hh],
                          preferred_element_type=jnp.float32)       # (S, hd)
            k_scr[hh] = _layernorm(k_h, kg, kb).astype(jnp.bfloat16)
            v_scr[hh] = jnp.dot(hx16, wv_ref[hh],
                                preferred_element_type=jnp.float32
                                ).astype(jnp.bfloat16)
            return carry

        jax.lax.fori_loop(0, H, kv_head, 0)

    # ---- query tile ----
    q0 = pl.multiple_of(qt * TQ, TQ)
    x_q = x_ref[pl.ds(q0, TQ), :].astype(jnp.float32)               # (TQ, D)
    h_q = _layernorm(x_q, ln1_g_ref[...], ln1_b_ref[...])
    h_q16 = h_q.astype(jnp.bfloat16)
    keep = mask_ref[...] != 0                                       # (TQ, S)
    qg, qb = qn_g_ref[...], qn_b_ref[...]    # 1/sqrt(hd) already folded in

    def head_body(hh, acc):
        q_h = jnp.dot(h_q16, wq_ref[hh],
                      preferred_element_type=jnp.float32)           # (TQ, hd)
        q_h = _layernorm(q_h, qg, qb).astype(jnp.bfloat16)
        logits = jax.lax.dot_general(
            q_h, k_scr[hh], (((1,), (1,)), ((), ())),
            preferred_element_type=jnp.float32)                     # (TQ, S)
        logits = jnp.where(keep, logits, _NEG_BIG)
        m = jnp.max(logits, axis=-1, keepdims=True)
        p = jnp.exp(logits - m)
        l = jnp.sum(p, axis=-1, keepdims=True)
        ctx = jnp.dot(p.astype(jnp.bfloat16), v_scr[hh],
                      preferred_element_type=jnp.float32)           # (TQ, hd)
        ctx = ctx * pl.reciprocal(l, approx=True)                   # normalize post-PV
        return acc + jnp.dot(ctx.astype(jnp.bfloat16), proj_w_ref[hh],
                             preferred_element_type=jnp.float32)    # (TQ, D)

    acc = jax.lax.fori_loop(0, H, head_body, jnp.zeros((TQ, D), jnp.float32))
    x1 = x_q + acc + proj_b_ref[...]

    # ---- MLP branch: x1 + mlp(norm2(x1)), hidden dim in chunks ----
    h2 = _layernorm(x1, ln2_g_ref[...], ln2_b_ref[...]).astype(jnp.bfloat16)
    n_chunks = fc1_w_ref.shape[0]

    def mlp_body(c, macc):
        a = jnp.dot(h2, fc1_w_ref[c],
                    preferred_element_type=jnp.float32) + fc1_b_ref[c]
        # exact GELU (nn.GELU default): 0.5 * x * (1 + erf(x / sqrt(2)))
        a = 0.5 * a * (1.0 + jax.lax.erf(a * _INV_SQRT2))
        return macc + jnp.dot(a.astype(jnp.bfloat16), fc2_w_ref[c],
                              preferred_element_type=jnp.float32)

    mlp_acc = jax.lax.fori_loop(0, n_chunks, mlp_body,
                                jnp.zeros((TQ, D), jnp.float32))
    o_ref[...] = (x1 + mlp_acc + fc2_b_ref[...]).astype(o_ref.dtype)


def _pick_tile(n: int, cap: int) -> int:
    """Largest power-of-two-ish tile <= cap that divides n (else n itself)."""
    if n <= cap:
        return n
    t = cap
    while t >= 8:
        if n % t == 0:
            return t
        t //= 2
    return n


def _vmem_limit_bytes() -> int:
    # v5e/v6e: 128 MiB VMEM per TensorCore, v7x: 64 MiB -- derive the scoped
    # budget from the device instead of one shared constant.
    try:
        cap = pltpu.get_tpu_info().vmem_capacity_bytes
    except Exception:
        cap = 128 * 1024 * 1024
    return min(int(cap * 0.85), 110 * 1024 * 1024)


def _const_spec(shape):
    """Full-array BlockSpec with constant index map; single-buffered when the
    installed JAX supports pipeline_mode (weights are re-used every step)."""
    ndim = len(shape)
    idx = lambda b, q, _n=ndim: (0,) * _n
    buffered = getattr(pl, "Buffered", None)
    if buffered is not None:
        try:
            return pl.BlockSpec(shape, idx, pipeline_mode=buffered(1))
        except Exception:
            pass
    return pl.BlockSpec(shape, idx)


def transformer_block(x, mask, params, *, num_heads: int):
    B, S, D = x.shape
    H = num_heads
    hd = D // H
    scale = float(hd) ** -0.5
    hidden = params["fc1_w"].shape[1]

    TQ = _pick_tile(S, 256)           # query tile (sequence grid axis)
    NQ = S // TQ
    mlp_chunk = _pick_tile(hidden, 512)
    n_chunks = hidden // mlp_chunk

    # ---- weight prep (dtype / head-major layout plumbing; done once per call,
    # in a real model it would be amortized across all layers) ----
    bf16 = jnp.bfloat16
    qkv_w = params["qkv_w"]

    def head_major(w):                # (D, D) -> (H, D, hd)
        return jnp.transpose(w.reshape(D, H, hd), (1, 0, 2)).astype(bf16)

    prepared = {
        "ln1_g": params["ln1_g"].reshape(1, D),
        "ln1_b": params["ln1_b"].reshape(1, D),
        "wq": head_major(qkv_w[:, 0 * D:1 * D]),
        "wk": head_major(qkv_w[:, 1 * D:2 * D]),
        "wv": head_major(qkv_w[:, 2 * D:3 * D]),
        # attention scale folded into q's LayerNorm affine
        "qn_g": (params["qn_g"] * scale).reshape(1, hd),
        "qn_b": (params["qn_b"] * scale).reshape(1, hd),
        "kn_g": params["kn_g"].reshape(1, hd),
        "kn_b": params["kn_b"].reshape(1, hd),
        "proj_w": params["proj_w"].reshape(H, hd, D).astype(bf16),
        "proj_b": params["proj_b"].reshape(1, D),
        "ln2_g": params["ln2_g"].reshape(1, D),
        "ln2_b": params["ln2_b"].reshape(1, D),
        "fc1_w": jnp.transpose(params["fc1_w"].reshape(D, n_chunks, mlp_chunk),
                               (1, 0, 2)).astype(bf16),
        "fc1_b": params["fc1_b"].reshape(n_chunks, 1, mlp_chunk),
        "fc2_w": params["fc2_w"].reshape(n_chunks, mlp_chunk, D).astype(bf16),
        "fc2_b": params["fc2_b"].reshape(1, D),
    }
    weight_order = [
        "ln1_g", "ln1_b", "wq", "wk", "wv",
        "qn_g", "qn_b", "kn_g", "kn_b",
        "proj_w", "proj_b", "ln2_g", "ln2_b",
        "fc1_w", "fc1_b", "fc2_w", "fc2_b",
    ]
    weight_specs = [_const_spec(prepared[n].shape) for n in weight_order]

    kernel = functools.partial(
        transformer_block_kernel, num_heads=H, q_tile=TQ)

    return pl.pallas_call(
        kernel,
        out_shape=jax.ShapeDtypeStruct((B, S, D), x.dtype),
        grid_spec=pltpu.PrefetchScalarGridSpec(
            num_scalar_prefetch=0,
            grid=(B, NQ),
            in_specs=[
                # full-sequence x (constant in qt -> fetched once per batch elt)
                pl.BlockSpec((None, S, D), lambda b, q: (b, 0, 0)),
                # mask rows for this query tile only
                pl.BlockSpec((None, TQ, S), lambda b, q: (b, q, 0)),
            ] + weight_specs,
            out_specs=pl.BlockSpec((None, TQ, D), lambda b, q: (b, q, 0)),
            scratch_shapes=[
                pltpu.VMEM((H, S, hd), jnp.bfloat16),   # normalized K (head-major)
                pltpu.VMEM((H, S, hd), jnp.bfloat16),   # V (head-major)
            ],
        ),
        compiler_params=pltpu.CompilerParams(
            # B parallel (megacore); q-tile axis arbitrary (reuses K/V scratch).
            dimension_semantics=("parallel", "arbitrary"),
            vmem_limit_bytes=_vmem_limit_bytes(),
        ),
    )(x, mask, *[prepared[n] for n in weight_order])


def init_params(key, dim, num_heads, mlp_ratio=4.0):
    hd = dim // num_heads
    hidden = int(dim * mlp_ratio)
    ks = jax.random.split(key, 6)
    s = 0.02
    return {
        "ln1_g": jnp.ones((dim,), jnp.float32),
        "ln1_b": jnp.zeros((dim,), jnp.float32),
        "qkv_w": s * jax.random.normal(ks[0], (dim, 3 * dim), jnp.float32),
        "qn_g": jnp.ones((hd,), jnp.float32),
        "qn_b": jnp.zeros((hd,), jnp.float32),
        "kn_g": jnp.ones((hd,), jnp.float32),
        "kn_b": jnp.zeros((hd,), jnp.float32),
        "proj_w": s * jax.random.normal(ks[1], (dim, dim), jnp.float32),
        "proj_b": s * jax.random.normal(ks[2], (dim,), jnp.float32),
        "ln2_g": jnp.ones((dim,), jnp.float32),
        "ln2_b": jnp.zeros((dim,), jnp.float32),
        "fc1_w": s * jax.random.normal(ks[3], (dim, hidden), jnp.float32),
        "fc1_b": s * jax.random.normal(ks[4], (hidden,), jnp.float32),
        "fc2_w": s * jax.random.normal(ks[5], (hidden, dim), jnp.float32),
        "fc2_b": jnp.zeros((dim,), jnp.float32),
    }


def transformer_block_ref(x, mask, params, *, num_heads: int):
    """Pure-JAX reference mirroring the PyTorch forward (dropout=0 / eval)."""
    B, S, D = x.shape
    hd = D // num_heads
    scale = hd ** -0.5

    h = _layernorm(x, params["ln1_g"], params["ln1_b"])
    qkv = h @ params["qkv_w"]                                   # (B, S, 3D)
    qkv = qkv.reshape(B, S, 3, num_heads, hd).transpose(2, 0, 3, 1, 4)
    q, k, v = qkv[0], qkv[1], qkv[2]                            # (B, H, S, hd)
    q = _layernorm(q, params["qn_g"], params["qn_b"])
    k = _layernorm(k, params["kn_g"], params["kn_b"])
    attn = jnp.einsum("bhqd,bhkd->bhqk", q, k) * scale
    attn = jnp.where(mask[:, None, :, :] == 0, -jnp.inf, attn)
    attn = jax.nn.softmax(attn, axis=-1)
    out = jnp.einsum("bhqk,bhkd->bhqd", attn, v)
    out = out.transpose(0, 2, 1, 3).reshape(B, S, D)
    out = out @ params["proj_w"] + params["proj_b"]
    x = x + out

    h2 = _layernorm(x, params["ln2_g"], params["ln2_b"])
    h2 = h2 @ params["fc1_w"] + params["fc1_b"]
    h2 = 0.5 * h2 * (1.0 + jax.lax.erf(h2 * _INV_SQRT2))
    h2 = h2 @ params["fc2_w"] + params["fc2_b"]
    return x + h2


if __name__ == "__main__":
    B, S, D, NUM_HEADS = 2, 8, 32, 4

    key = jax.random.PRNGKey(0)
    kx, kp, km = jax.random.split(key, 3)
    x = jax.random.normal(kx, (B, S, D), jnp.float32)
    params = init_params(kp, D, NUM_HEADS)

    # mask: (B, S, S); 0 = masked out.  Keep the diagonal so no row is fully masked.
    mask = (jax.random.uniform(km, (B, S, S)) > 0.3).astype(jnp.float32)
    mask = jnp.maximum(mask, jnp.eye(S, dtype=jnp.float32)[None])

    out = transformer_block(x, mask, params, num_heads=NUM_HEADS)
    out = jax.block_until_ready(out)

    ref = transformer_block_ref(x, mask, params, num_heads=NUM_HEADS)
    assert out.shape == (B, S, D)
    max_err = float(jnp.max(jnp.abs(out - ref)))
    assert jnp.allclose(out, ref, atol=1e-2, rtol=1e-2), max_err

    print("KERNEL_OK")
</pallas_src>

<mosaic_0001>
module attributes {stable_mosaic.version = 11 : i64} {
  func.func @transformer_block_kernel(%arg0: i32, %arg1: i32, %arg2: memref<1x8x32xf32, #tpu.memory_space<vmem>>, %arg3: memref<1x8x8xf32, #tpu.memory_space<vmem>>, %arg4: memref<1x32xf32, #tpu.memory_space<vmem>>, %arg5: memref<1x32xf32, #tpu.memory_space<vmem>>, %arg6: memref<4x32x8xbf16, #tpu.memory_space<vmem>>, %arg7: memref<4x32x8xbf16, #tpu.memory_space<vmem>>, %arg8: memref<4x32x8xbf16, #tpu.memory_space<vmem>>, %arg9: memref<1x8xf32, #tpu.memory_space<vmem>>, %arg10: memref<1x8xf32, #tpu.memory_space<vmem>>, %arg11: memref<1x8xf32, #tpu.memory_space<vmem>>, %arg12: memref<1x8xf32, #tpu.memory_space<vmem>>, %arg13: memref<4x8x32xbf16, #tpu.memory_space<vmem>>, %arg14: memref<1x32xf32, #tpu.memory_space<vmem>>, %arg15: memref<1x32xf32, #tpu.memory_space<vmem>>, %arg16: memref<1x32xf32, #tpu.memory_space<vmem>>, %arg17: memref<1x32x128xbf16, #tpu.memory_space<vmem>>, %arg18: memref<1x1x128xf32, #tpu.memory_space<vmem>>, %arg19: memref<1x128x32xbf16, #tpu.memory_space<vmem>>, %arg20: memref<1x32xf32, #tpu.memory_space<vmem>>, %arg21: memref<1x8x32xf32, #tpu.memory_space<vmem>>, %arg22: memref<4x8x8xbf16, #tpu.memory_space<vmem>>, %arg23: memref<4x8x8xbf16, #tpu.memory_space<vmem>>) attributes {dimension_semantics = [#tpu.dimension_semantics<parallel>, #tpu.dimension_semantics<arbitrary>], iteration_bounds = array<i64: 2, 1>, scalar_prefetch = 0 : i64, scratch_operands = 2 : i64, tpu.core_type = #tpu.core_type<tc>, window_params = [{transform_indices = @transform_0, window_bounds = array<i64: 1, 8, 32>}, {transform_indices = @transform_1, window_bounds = array<i64: 1, 8, 8>}, {pipeline_mode = #tpu.pipeline_mode<synchronous>, transform_indices = @transform_2, window_bounds = array<i64: 1, 32>}, {pipeline_mode = #tpu.pipeline_mode<synchronous>, transform_indices = @transform_3, window_bounds = array<i64: 1, 32>}, {pipeline_mode = #tpu.pipeline_mode<synchronous>, transform_indices = @transform_4, window_bounds = array<i64: 4, 32, 8>}, {pipeline_mode = #tpu.pipeline_mode<synchronous>, transform_indices = @transform_5, window_bounds = array<i64: 4, 32, 8>}, {pipeline_mode = #tpu.pipeline_mode<synchronous>, transform_indices = @transform_6, window_bounds = array<i64: 4, 32, 8>}, {pipeline_mode = #tpu.pipeline_mode<synchronous>, transform_indices = @transform_7, window_bounds = array<i64: 1, 8>}, {pipeline_mode = #tpu.pipeline_mode<synchronous>, transform_indices = @transform_8, window_bounds = array<i64: 1, 8>}, {pipeline_mode = #tpu.pipeline_mode<synchronous>, transform_indices = @transform_9, window_bounds = array<i64: 1, 8>}, {pipeline_mode = #tpu.pipeline_mode<synchronous>, transform_indices = @transform_10, window_bounds = array<i64: 1, 8>}, {pipeline_mode = #tpu.pipeline_mode<synchronous>, transform_indices = @transform_11, window_bounds = array<i64: 4, 8, 32>}, {pipeline_mode = #tpu.pipeline_mode<synchronous>, transform_indices = @transform_12, window_bounds = array<i64: 1, 32>}, {pipeline_mode = #tpu.pipeline_mode<synchronous>, transform_indices = @transform_13, window_bounds = array<i64: 1, 32>}, {pipeline_mode = #tpu.pipeline_mode<synchronous>, transform_indices = @transform_14, window_bounds = array<i64: 1, 32>}, {pipeline_mode = #tpu.pipeline_mode<synchronous>, transform_indices = @transform_15, window_bounds = array<i64: 1, 32, 128>}, {pipeline_mode = #tpu.pipeline_mode<synchronous>, transform_indices = @transform_16, window_bounds = array<i64: 1, 1, 128>}, {pipeline_mode = #tpu.pipeline_mode<synchronous>, transform_indices = @transform_17, window_bounds = array<i64: 1, 128, 32>}, {pipeline_mode = #tpu.pipeline_mode<synchronous>, transform_indices = @transform_18, window_bounds = array<i64: 1, 32>}, {transform_indices = @transform_19, window_bounds = array<i64: 1, 8, 32>}]} {
    %c0_i32 = arith.constant 0 : i32
    %0 = arith.cmpi eq, %arg1, %c0_i32 : i32
    %1 = arith.extui %0 : i1 to i32
    %c0_i32_0 = arith.constant 0 : i32
    %2 = arith.cmpi ne, %1, %c0_i32_0 : i32
    scf.if %2 {
      %c0_51 = arith.constant 0 : index
      %c0_52 = arith.constant 0 : index
      %c0_53 = arith.constant 0 : index
      %106 = vector.load %arg2[%c0_51, %c0_52, %c0_53] : memref<1x8x32xf32, #tpu.memory_space<vmem>>, vector<1x8x32xf32>
      %107 = vector.shape_cast %106 : vector<1x8x32xf32> to vector<8x32xf32>
      %c0_54 = arith.constant 0 : index
      %c0_55 = arith.constant 0 : index
      %108 = vector.load %arg4[%c0_54, %c0_55] : memref<1x32xf32, #tpu.memory_space<vmem>>, vector<1x32xf32>
      %c0_56 = arith.constant 0 : index
      %c0_57 = arith.constant 0 : index
      %109 = vector.load %arg5[%c0_56, %c0_57] : memref<1x32xf32, #tpu.memory_space<vmem>>, vector<1x32xf32>
      %cst_58 = arith.constant dense<0.000000e+00> : vector<8xf32>
      %110 = vector.multi_reduction <add>, %107, %cst_58 [1] : vector<8x32xf32> to vector<8xf32>
      %111 = vector.shape_cast %110 : vector<8xf32> to vector<8x1xf32>
      %cst_59 = arith.constant 3.200000e+01 : f32
      %112 = vector.broadcast %cst_59 : f32 to vector<8x1xf32>
      %113 = arith.divf %111, %112 : vector<8x1xf32>
      %114 = vector.broadcast %113 : vector<8x1xf32> to vector<8x32xf32>
      %115 = arith.subf %107, %114 : vector<8x32xf32>
      %116 = vector.broadcast %113 : vector<8x1xf32> to vector<8x32xf32>
      %117 = arith.subf %107, %116 : vector<8x32xf32>
      %118 = arith.mulf %115, %117 : vector<8x32xf32>
      %cst_60 = arith.constant dense<0.000000e+00> : vector<8xf32>
      %119 = vector.multi_reduction <add>, %118, %cst_60 [1] : vector<8x32xf32> to vector<8xf32>
      %120 = vector.shape_cast %119 : vector<8xf32> to vector<8x1xf32>
      %cst_61 = arith.constant 3.200000e+01 : f32
      %121 = vector.broadcast %cst_61 : f32 to vector<8x1xf32>
      %122 = arith.divf %120, %121 : vector<8x1xf32>
      %123 = vector.broadcast %113 : vector<8x1xf32> to vector<8x32xf32>
      %124 = arith.subf %107, %123 : vector<8x32xf32>
      %cst_62 = arith.constant 9.99999974E-6 : f32
      %125 = vector.broadcast %cst_62 : f32 to vector<8x1xf32>
      %126 = arith.addf %122, %125 : vector<8x1xf32>
      %127 = math.rsqrt %126 : vector<8x1xf32>
      %128 = vector.broadcast %127 : vector<8x1xf32> to vector<8x32xf32>
      %129 = arith.mulf %124, %128 : vector<8x32xf32>
      %130 = vector.broadcast %108 : vector<1x32xf32> to vector<8x32xf32>
      %131 = arith.mulf %129, %130 : vector<8x32xf32>
      %132 = vector.broadcast %109 : vector<1x32xf32> to vector<8x32xf32>
      %133 = arith.addf %131, %132 : vector<8x32xf32>
      %134 = arith.truncf %133 : vector<8x32xf32> to vector<8x32xbf16>
      %c0_63 = arith.constant 0 : index
      %c0_64 = arith.constant 0 : index
      %135 = vector.load %arg11[%c0_63, %c0_64] : memref<1x8xf32, #tpu.memory_space<vmem>>, vector<1x8xf32>
      %c0_65 = arith.constant 0 : index
      %c0_66 = arith.constant 0 : index
      %136 = vector.load %arg12[%c0_65, %c0_66] : memref<1x8xf32, #tpu.memory_space<vmem>>, vector<1x8xf32>
      %c0_i32_67 = arith.constant 0 : i32
      %c4_i32_68 = arith.constant 4 : i32
      %137 = arith.addi %c0_i32_67, %c4_i32_68 : i32
      %c1_i32_69 = arith.constant 1 : i32
      scf.for %arg24 = %c0_i32_67 to %137 step %c1_i32_69  : i32 {
        %138 = arith.index_cast %arg24 : i32 to index
        %c0_71 = arith.constant 0 : index
        %c0_72 = arith.constant 0 : index
        %139 = vector.load %arg7[%138, %c0_71, %c0_72] : memref<4x32x8xbf16, #tpu.memory_space<vmem>>, vector<1x32x8xbf16>
        %140 = vector.shape_cast %139 : vector<1x32x8xbf16> to vector<32x8xbf16>
        %cst_73 = arith.constant dense<0.000000e+00> : vector<8x8xf32>
        %141 = tpu.matmul %134, %140, %cst_73 {dimension_numbers = #tpu.dot_dimension_numbers<[1], [0], [0], [1], [0, 0, 1, 1], [], []>} : vector<8x32xbf16>, vector<32x8xbf16>, vector<8x8xf32> -> vector<8x8xf32>
        %cst_74 = arith.constant dense<0.000000e+00> : vector<8xf32>
        %142 = vector.multi_reduction <add>, %141, %cst_74 [1] : vector<8x8xf32> to vector<8xf32>
        %143 = vector.shape_cast %142 : vector<8xf32> to vector<8x1xf32>
        %cst_75 = arith.constant 8.000000e+00 : f32
        %144 = vector.broadcast %cst_75 : f32 to vector<8x1xf32>
        %145 = arith.divf %143, %144 : vector<8x1xf32>
        %146 = vector.broadcast %145 : vector<8x1xf32> to vector<8x8xf32>
        %147 = arith.subf %141, %146 : vector<8x8xf32>
        %148 = vector.broadcast %145 : vector<8x1xf32> to vector<8x8xf32>
        %149 = arith.subf %141, %148 : vector<8x8xf32>
        %150 = arith.mulf %147, %149 : vector<8x8xf32>
        %cst_76 = arith.constant dense<0.000000e+00> : vector<8xf32>
        %151 = vector.multi_reduction <add>, %150, %cst_76 [1] : vector<8x8xf32> to vector<8xf32>
        %152 = vector.shape_cast %151 : vector<8xf32> to vector<8x1xf32>
        %cst_77 = arith.constant 8.000000e+00 : f32
        %153 = vector.broadcast %cst_77 : f32 to vector<8x1xf32>
        %154 = arith.divf %152, %153 : vector<8x1xf32>
        %155 = vector.broadcast %145 : vector<8x1xf32> to vector<8x8xf32>
        %156 = arith.subf %141, %155 : vector<8x8xf32>
        %cst_78 = arith.constant 9.99999974E-6 : f32
        %157 = vector.broadcast %cst_78 : f32 to vector<8x1xf32>
        %158 = arith.addf %154, %157 : vector<8x1xf32>
        %159 = math.rsqrt %158 : vector<8x1xf32>
        %160 = vector.broadcast %159 : vector<8x1xf32> to vector<8x8xf32>
        %161 = arith.mulf %156, %160 : vector<8x8xf32>
        %162 = vector.broadcast %135 : vector<1x8xf32> to vector<8x8xf32>
        %163 = arith.mulf %161, %162 : vector<8x8xf32>
        %164 = vector.broadcast %136 : vector<1x8xf32> to vector<8x8xf32>
        %165 = arith.addf %163, %164 : vector<8x8xf32>
        %166 = arith.truncf %165 : vector<8x8xf32> to vector<8x8xbf16>
        %167 = arith.index_cast %arg24 : i32 to index
        %c0_79 = arith.constant 0 : index
        %c0_80 = arith.constant 0 : index
        %168 = vector.load %arg22[%167, %c0_79, %c0_80] : memref<4x8x8xbf16, #tpu.memory_space<vmem>>, vector<1x8x8xbf16>
        %169 = vector.shape_cast %168 : vector<1x8x8xbf16> to vector<8x8xbf16>
        %170 = vector.shape_cast %166 : vector<8x8xbf16> to vector<1x8x8xbf16>
        tpu.vector_store %arg22[%167, %c0_79, %c0_80], %170 {strides = array<i32>} : memref<4x8x8xbf16, #tpu.memory_space<vmem>>, vector<1x8x8xbf16>,
        %171 = arith.index_cast %arg24 : i32 to index
        %c0_81 = arith.constant 0 : index
        %c0_82 = arith.constant 0 : index
        %172 = vector.load %arg8[%171, %c0_81, %c0_82] : memref<4x32x8xbf16, #tpu.memory_space<vmem>>, vector<1x32x8xbf16>
        %173 = vector.shape_cast %172 : vector<1x32x8xbf16> to vector<32x8xbf16>
        %cst_83 = arith.constant dense<0.000000e+00> : vector<8x8xf32>
        %174 = tpu.matmul %134, %173, %cst_83 {dimension_numbers = #tpu.dot_dimension_numbers<[1], [0], [0], [1], [0, 0, 1, 1], [], []>} : vector<8x32xbf16>, vector<32x8xbf16>, vector<8x8xf32> -> vector<8x8xf32>
        %175 = arith.truncf %174 : vector<8x8xf32> to vector<8x8xbf16>
        %176 = arith.index_cast %arg24 : i32 to index
        %c0_84 = arith.constant 0 : index
        %c0_85 = arith.constant 0 : index
        %177 = vector.load %arg23[%176, %c0_84, %c0_85] : memref<4x8x8xbf16, #tpu.memory_space<vmem>>, vector<1x8x8xbf16>
        %178 = vector.shape_cast %177 : vector<1x8x8xbf16> to vector<8x8xbf16>
        %179 = vector.shape_cast %175 : vector<8x8xbf16> to vector<1x8x8xbf16>
        tpu.vector_store %arg23[%176, %c0_84, %c0_85], %179 {strides = array<i32>} : memref<4x8x8xbf16, #tpu.memory_space<vmem>>, vector<1x8x8xbf16>,
      }
      %c4_i32_70 = arith.constant 4 : i32
    } else {
    }
    %c8_i32 = arith.constant 8 : i32
    %3 = arith.muli %arg1, %c8_i32 : i32
    %4 = tpu.assume_multiple %3, 8 : i32
    %c0 = arith.constant 0 : index
    %5 = arith.index_cast %4 : i32 to index
    %c0_1 = arith.constant 0 : index
    %6 = vector.load %arg2[%c0, %5, %c0_1] : memref<1x8x32xf32, #tpu.memory_space<vmem>>, vector<1x8x32xf32>
    %7 = vector.shape_cast %6 : vector<1x8x32xf32> to vector<8x32xf32>
    %c0_2 = arith.constant 0 : index
    %c0_3 = arith.constant 0 : index
    %8 = vector.load %arg4[%c0_2, %c0_3] : memref<1x32xf32, #tpu.memory_space<vmem>>, vector<1x32xf32>
    %c0_4 = arith.constant 0 : index
    %c0_5 = arith.constant 0 : index
    %9 = vector.load %arg5[%c0_4, %c0_5] : memref<1x32xf32, #tpu.memory_space<vmem>>, vector<1x32xf32>
    %cst = arith.constant dense<0.000000e+00> : vector<8xf32>
    %10 = vector.multi_reduction <add>, %7, %cst [1] : vector<8x32xf32> to vector<8xf32>
    %11 = vector.shape_cast %10 : vector<8xf32> to vector<8x1xf32>
    %cst_6 = arith.constant 3.200000e+01 : f32
    %12 = vector.broadcast %cst_6 : f32 to vector<8x1xf32>
    %13 = arith.divf %11, %12 : vector<8x1xf32>
    %14 = vector.broadcast %13 : vector<8x1xf32> to vector<8x32xf32>
    %15 = arith.subf %7, %14 : vector<8x32xf32>
    %16 = vector.broadcast %13 : vector<8x1xf32> to vector<8x32xf32>
    %17 = arith.subf %7, %16 : vector<8x32xf32>
    %18 = arith.mulf %15, %17 : vector<8x32xf32>
    %cst_7 = arith.constant dense<0.000000e+00> : vector<8xf32>
    %19 = vector.multi_reduction <add>, %18, %cst_7 [1] : vector<8x32xf32> to vector<8xf32>
    %20 = vector.shape_cast %19 : vector<8xf32> to vector<8x1xf32>
    %cst_8 = arith.constant 3.200000e+01 : f32
    %21 = vector.broadcast %cst_8 : f32 to vector<8x1xf32>
    %22 = arith.divf %20, %21 : vector<8x1xf32>
    %23 = vector.broadcast %13 : vector<8x1xf32> to vector<8x32xf32>
    %24 = arith.subf %7, %23 : vector<8x32xf32>
    %cst_9 = arith.constant 9.99999974E-6 : f32
    %25 = vector.broadcast %cst_9 : f32 to vector<8x1xf32>
    %26 = arith.addf %22, %25 : vector<8x1xf32>
    %27 = math.rsqrt %26 : vector<8x1xf32>
    %28 = vector.broadcast %27 : vector<8x1xf32> to vector<8x32xf32>
    %29 = arith.mulf %24, %28 : vector<8x32xf32>
    %30 = vector.broadcast %8 : vector<1x32xf32> to vector<8x32xf32>
    %31 = arith.mulf %29, %30 : vector<8x32xf32>
    %32 = vector.broadcast %9 : vector<1x32xf32> to vector<8x32xf32>
    %33 = arith.addf %31, %32 : vector<8x32xf32>
    %34 = arith.truncf %33 : vector<8x32xf32> to vector<8x32xbf16>
    %c0_10 = arith.constant 0 : index
    %c0_11 = arith.constant 0 : index
    %c0_12 = arith.constant 0 : index
    %35 = vector.load %arg3[%c0_10, %c0_11, %c0_12] : memref<1x8x8xf32, #tpu.memory_space<vmem>>, vector<1x8x8xf32>
    %36 = vector.shape_cast %35 : vector<1x8x8xf32> to vector<8x8xf32>
    %cst_13 = arith.constant 0.000000e+00 : f32
    %37 = vector.broadcast %cst_13 : f32 to vector<8x8xf32>
    %38 = arith.cmpf one, %36, %37 : vector<8x8xf32>
    %c0_14 = arith.constant 0 : index
    %c0_15 = arith.constant 0 : index
    %39 = vector.load %arg9[%c0_14, %c0_15] : memref<1x8xf32, #tpu.memory_space<vmem>>, vector<1x8xf32>
    %c0_16 = arith.constant 0 : index
    %c0_17 = arith.constant 0 : index
    %40 = vector.load %arg10[%c0_16, %c0_17] : memref<1x8xf32, #tpu.memory_space<vmem>>, vector<1x8xf32>
    %cst_18 = arith.constant 0.000000e+00 : f32
    %41 = vector.broadcast %cst_18 : f32 to vector<8x32xf32>
    %c0_i32_19 = arith.constant 0 : i32
    %c4_i32 = arith.constant 4 : i32
    %42 = arith.addi %c0_i32_19, %c4_i32 : i32
    %c1_i32 = arith.constant 1 : i32
    %43 = scf.for %arg24 = %c0_i32_19 to %42 step %c1_i32 iter_args(%arg25 = %41) -> (vector<8x32xf32>)  : i32 {
      %106 = arith.index_cast %arg24 : i32 to index
      %c0_51 = arith.constant 0 : index
      %c0_52 = arith.constant 0 : index
      %107 = vector.load %arg6[%106, %c0_51, %c0_52] : memref<4x32x8xbf16, #tpu.memory_space<vmem>>, vector<1x32x8xbf16>
      %108 = vector.shape_cast %107 : vector<1x32x8xbf16> to vector<32x8xbf16>
      %cst_53 = arith.constant dense<0.000000e+00> : vector<8x8xf32>
      %109 = tpu.matmul %34, %108, %cst_53 {dimension_numbers = #tpu.dot_dimension_numbers<[1], [0], [0], [1], [0, 0, 1, 1], [], []>} : vector<8x32xbf16>, vector<32x8xbf16>, vector<8x8xf32> -> vector<8x8xf32>
      %cst_54 = arith.constant dense<0.000000e+00> : vector<8xf32>
      %110 = vector.multi_reduction <add>, %109, %cst_54 [1] : vector<8x8xf32> to vector<8xf32>
      %111 = vector.shape_cast %110 : vector<8xf32> to vector<8x1xf32>
      %cst_55 = arith.constant 8.000000e+00 : f32
      %112 = vector.broadcast %cst_55 : f32 to vector<8x1xf32>
      %113 = arith.divf %111, %112 : vector<8x1xf32>
      %114 = vector.broadcast %113 : vector<8x1xf32> to vector<8x8xf32>
      %115 = arith.subf %109, %114 : vector<8x8xf32>
      %116 = vector.broadcast %113 : vector<8x1xf32> to vector<8x8xf32>
      %117 = arith.subf %109, %116 : vector<8x8xf32>
      %118 = arith.mulf %115, %117 : vector<8x8xf32>
      %cst_56 = arith.constant dense<0.000000e+00> : vector<8xf32>
      %119 = vector.multi_reduction <add>, %118, %cst_56 [1] : vector<8x8xf32> to vector<8xf32>
      %120 = vector.shape_cast %119 : vector<8xf32> to vector<8x1xf32>
      %cst_57 = arith.constant 8.000000e+00 : f32
      %121 = vector.broadcast %cst_57 : f32 to vector<8x1xf32>
      %122 = arith.divf %120, %121 : vector<8x1xf32>
      %123 = vector.broadcast %113 : vector<8x1xf32> to vector<8x8xf32>
      %124 = arith.subf %109, %123 : vector<8x8xf32>
      %cst_58 = arith.constant 9.99999974E-6 : f32
      %125 = vector.broadcast %cst_58 : f32 to vector<8x1xf32>
      %126 = arith.addf %122, %125 : vector<8x1xf32>
      %127 = math.rsqrt %126 : vector<8x1xf32>
      %128 = vector.broadcast %127 : vector<8x1xf32> to vector<8x8xf32>
      %129 = arith.mulf %124, %128 : vector<8x8xf32>
      %130 = vector.broadcast %39 : vector<1x8xf32> to vector<8x8xf32>
      %131 = arith.mulf %129, %130 : vector<8x8xf32>
      %132 = vector.broadcast %40 : vector<1x8xf32> to vector<8x8xf32>
      %133 = arith.addf %131, %132 : vector<8x8xf32>
      %134 = arith.truncf %133 : vector<8x8xf32> to vector<8x8xbf16>
      %135 = arith.index_cast %arg24 : i32 to index
      %c0_59 = arith.constant 0 : index
      %c0_60 = arith.constant 0 : index
      %136 = vector.load %arg22[%135, %c0_59, %c0_60] : memref<4x8x8xbf16, #tpu.memory_space<vmem>>, vector<1x8x8xbf16>
      %137 = vector.shape_cast %136 : vector<1x8x8xbf16> to vector<8x8xbf16>
      %cst_61 = arith.constant dense<0.000000e+00> : vector<8x8xf32>
      %138 = tpu.matmul %134, %137, %cst_61 {dimension_numbers = #tpu.dot_dimension_numbers<[1], [1], [0], [0], [0, 0, 1, 0], [], []>} : vector<8x8xbf16>, vector<8x8xbf16>, vector<8x8xf32> -> vector<8x8xf32>
      %cst_62 = arith.constant -1.000000e+30 : f32
      %139 = vector.broadcast %cst_62 : f32 to vector<8x8xf32>
      %140 = arith.select %38, %138, %139 : vector<8x8xi1>, vector<8x8xf32>
      %cst_63 = arith.constant dense<0xFF800000> : vector<8xf32>
      %141 = vector.multi_reduction <maximumf>, %140, %cst_63 [1] : vector<8x8xf32> to vector<8xf32>
      %142 = vector.shape_cast %141 : vector<8xf32> to vector<8x1xf32>
      %143 = vector.broadcast %142 : vector<8x1xf32> to vector<8x8xf32>
      %144 = arith.subf %140, %143 : vector<8x8xf32>
      %145 = math.exp %144 : vector<8x8xf32>
      %cst_64 = arith.constant dense<0.000000e+00> : vector<8xf32>
      %146 = vector.multi_reduction <add>, %145, %cst_64 [1] : vector<8x8xf32> to vector<8xf32>
      %147 = vector.shape_cast %146 : vector<8xf32> to vector<8x1xf32>
      %148 = arith.truncf %145 : vector<8x8xf32> to vector<8x8xbf16>
      %149 = arith.index_cast %arg24 : i32 to index
      %c0_65 = arith.constant 0 : index
      %c0_66 = arith.constant 0 : index
      %150 = vector.load %arg23[%149, %c0_65, %c0_66] : memref<4x8x8xbf16, #tpu.memory_space<vmem>>, vector<1x8x8xbf16>
      %151 = vector.shape_cast %150 : vector<1x8x8xbf16> to vector<8x8xbf16>
      %cst_67 = arith.constant dense<0.000000e+00> : vector<8x8xf32>
      %152 = tpu.matmul %148, %151, %cst_67 {dimension_numbers = #tpu.dot_dimension_numbers<[1], [0], [0], [1], [0, 0, 1, 1], [], []>} : vector<8x8xbf16>, vector<8x8xbf16>, vector<8x8xf32> -> vector<8x8xf32>
      %153 = tpu.reciprocal %147 {approx = true} : vector<8x1xf32> -> vector<8x1xf32>
      %154 = vector.broadcast %153 : vector<8x1xf32> to vector<8x8xf32>
      %155 = arith.mulf %152, %154 : vector<8x8xf32>
      %156 = arith.truncf %155 : vector<8x8xf32> to vector<8x8xbf16>
      %157 = arith.index_cast %arg24 : i32 to index
      %c0_68 = arith.constant 0 : index
      %c0_69 = arith.constant 0 : index
      %158 = vector.load %arg13[%157, %c0_68, %c0_69] : memref<4x8x32xbf16, #tpu.memory_space<vmem>>, vector<1x8x32xbf16>
      %159 = vector.shape_cast %158 : vector<1x8x32xbf16> to vector<8x32xbf16>
      %cst_70 = arith.constant dense<0.000000e+00> : vector<8x32xf32>
      %160 = tpu.matmul %156, %159, %cst_70 {dimension_numbers = #tpu.dot_dimension_numbers<[1], [0], [0], [1], [0, 0, 1, 1], [], []>} : vector<8x8xbf16>, vector<8x32xbf16>, vector<8x32xf32> -> vector<8x32xf32>
      %161 = arith.addf %arg25, %160 : vector<8x32xf32>
      scf.yield %161 : vector<8x32xf32>
    }
    %c4_i32_20 = arith.constant 4 : i32
    %44 = arith.addf %7, %43 : vector<8x32xf32>
    %c0_21 = arith.constant 0 : index
    %c0_22 = arith.constant 0 : index
    %45 = vector.load %arg14[%c0_21, %c0_22] : memref<1x32xf32, #tpu.memory_space<vmem>>, vector<1x32xf32>
    %46 = vector.broadcast %45 : vector<1x32xf32> to vector<8x32xf32>
    %47 = arith.addf %44, %46 : vector<8x32xf32>
    %c0_23 = arith.constant 0 : index
    %c0_24 = arith.constant 0 : index
    %48 = vector.load %arg15[%c0_23, %c0_24] : memref<1x32xf32, #tpu.memory_space<vmem>>, vector<1x32xf32>
    %c0_25 = arith.constant 0 : index
    %c0_26 = arith.constant 0 : index
    %49 = vector.load %arg16[%c0_25, %c0_26] : memref<1x32xf32, #tpu.memory_space<vmem>>, vector<1x32xf32>
    %cst_27 = arith.constant dense<0.000000e+00> : vector<8xf32>
    %50 = vector.multi_reduction <add>, %47, %cst_27 [1] : vector<8x32xf32> to vector<8xf32>
    %51 = vector.shape_cast %50 : vector<8xf32> to vector<8x1xf32>
    %cst_28 = arith.constant 3.200000e+01 : f32
    %52 = vector.broadcast %cst_28 : f32 to vector<8x1xf32>
    %53 = arith.divf %51, %52 : vector<8x1xf32>
    %54 = vector.broadcast %53 : vector<8x1xf32> to vector<8x32xf32>
    %55 = arith.subf %47, %54 : vector<8x32xf32>
    %56 = vector.broadcast %53 : vector<8x1xf32> to vector<8x32xf32>
    %57 = arith.subf %47, %56 : vector<8x32xf32>
    %58 = arith.mulf %55, %57 : vector<8x32xf32>
    %cst_29 = arith.constant dense<0.000000e+00> : vector<8xf32>
    %59 = vector.multi_reduction <add>, %58, %cst_29 [1] : vector<8x32xf32> to vector<8xf32>
    %60 = vector.shape_cast %59 : vector<8xf32> to vector<8x1xf32>
    %cst_30 = arith.constant 3.200000e+01 : f32
    %61 = vector.broadcast %cst_30 : f32 to vector<8x1xf32>
    %62 = arith.divf %60, %61 : vector<8x1xf32>
    %63 = vector.broadcast %53 : vector<8x1xf32> to vector<8x32xf32>
    %64 = arith.subf %47, %63 : vector<8x32xf32>
    %cst_31 = arith.constant 9.99999974E-6 : f32
    %65 = vector.broadcast %cst_31 : f32 to vector<8x1xf32>
    %66 = arith.addf %62, %65 : vector<8x1xf32>
    %67 = math.rsqrt %66 : vector<8x1xf32>
    %68 = vector.broadcast %67 : vector<8x1xf32> to vector<8x32xf32>
    %69 = arith.mulf %64, %68 : vector<8x32xf32>
    %70 = vector.broadcast %48 : vector<1x32xf32> to vector<8x32xf32>
    %71 = arith.mulf %69, %70 : vector<8x32xf32>
    %72 = vector.broadcast %49 : vector<1x32xf32> to vector<8x32xf32>
    %73 = arith.addf %71, %72 : vector<8x32xf32>
    %74 = arith.truncf %73 : vector<8x32xf32> to vector<8x32xbf16>
    %cst_32 = arith.constant 0.000000e+00 : f32
    %75 = vector.broadcast %cst_32 : f32 to vector<8x32xf32>
    %c0_i32_33 = arith.constant 0 : i32
    %76 = arith.index_cast %c0_i32_33 : i32 to index
    %c0_34 = arith.constant 0 : index
    %c0_35 = arith.constant 0 : index
    %77 = vector.load %arg17[%76, %c0_34, %c0_35] : memref<1x32x128xbf16, #tpu.memory_space<vmem>>, vector<1x32x128xbf16>
    %78 = vector.shape_cast %77 : vector<1x32x128xbf16> to vector<32x128xbf16>
    %cst_36 = arith.constant dense<0.000000e+00> : vector<8x128xf32>
    %79 = tpu.matmul %74, %78, %cst_36 {dimension_numbers = #tpu.dot_dimension_numbers<[1], [0], [0], [1], [0, 0, 1, 1], [], []>} : vector<8x32xbf16>, vector<32x128xbf16>, vector<8x128xf32> -> vector<8x128xf32>
    %80 = arith.index_cast %c0_i32_33 : i32 to index
    %c0_37 = arith.constant 0 : index
    %c0_38 = arith.constant 0 : index
    %81 = vector.load %arg18[%80, %c0_37, %c0_38] : memref<1x1x128xf32, #tpu.memory_space<vmem>>, vector<1x1x128xf32>
    %82 = vector.shape_cast %81 : vector<1x1x128xf32> to vector<1x128xf32>
    %83 = vector.broadcast %82 : vector<1x128xf32> to vector<8x128xf32>
    %84 = arith.addf %79, %83 : vector<8x128xf32>
    %cst_39 = arith.constant 5.000000e-01 : f32
    %85 = vector.broadcast %cst_39 : f32 to vector<8x128xf32>
    %86 = arith.mulf %85, %84 : vector<8x128xf32>
    %cst_40 = arith.constant 0.707106769 : f32
    %87 = vector.broadcast %cst_40 : f32 to vector<8x128xf32>
    %88 = arith.mulf %84, %87 : vector<8x128xf32>
    %89 = math.erf %88 : vector<8x128xf32>
    %cst_41 = arith.constant 1.000000e+00 : f32
    %90 = vector.broadcast %cst_41 : f32 to vector<8x128xf32>
    %91 = arith.addf %90, %89 : vector<8x128xf32>
    %92 = arith.mulf %86, %91 : vector<8x128xf32>
    %93 = arith.truncf %92 : vector<8x128xf32> to vector<8x128xbf16>
    %94 = arith.index_cast %c0_i32_33 : i32 to index
    %c0_42 = arith.constant 0 : index
    %c0_43 = arith.constant 0 : index
    %95 = vector.load %arg19[%94, %c0_42, %c0_43] : memref<1x128x32xbf16, #tpu.memory_space<vmem>>, vector<1x128x32xbf16>
    %96 = vector.shape_cast %95 : vector<1x128x32xbf16> to vector<128x32xbf16>
    %cst_44 = arith.constant dense<0.000000e+00> : vector<8x32xf32>
    %97 = tpu.matmul %93, %96, %cst_44 {dimension_numbers = #tpu.dot_dimension_numbers<[1], [0], [0], [1], [0, 0, 1, 1], [], []>} : vector<8x128xbf16>, vector<128x32xbf16>, vector<8x32xf32> -> vector<8x32xf32>
    %98 = arith.addf %75, %97 : vector<8x32xf32>
    %c1_i32_45 = arith.constant 1 : i32
    %99 = arith.addf %47, %98 : vector<8x32xf32>
    %c0_46 = arith.constant 0 : index
    %c0_47 = arith.constant 0 : index
    %100 = vector.load %arg20[%c0_46, %c0_47] : memref<1x32xf32, #tpu.memory_space<vmem>>, vector<1x32xf32>
    %101 = vector.broadcast %100 : vector<1x32xf32> to vector<8x32xf32>
    %102 = arith.addf %99, %101 : vector<8x32xf32>
    %c0_48 = arith.constant 0 : index
    %c0_49 = arith.constant 0 : index
    %c0_50 = arith.constant 0 : index
    %103 = vector.load %arg21[%c0_48, %c0_49, %c0_50] : memref<1x8x32xf32, #tpu.memory_space<vmem>>, vector<1x8x32xf32>
    %104 = vector.shape_cast %103 : vector<1x8x32xf32> to vector<8x32xf32>
    %105 = vector.shape_cast %102 : vector<8x32xf32> to vector<1x8x32xf32>
    tpu.vector_store %arg21[%c0_48, %c0_49, %c0_50], %105 {strides = array<i32>} : memref<1x8x32xf32, #tpu.memory_space<vmem>>, vector<1x8x32xf32>,
    return
  }
  func.func @transform_0(%arg0: i32, %arg1: i32) -> (i32, i32, i32) {
    %c0_i32 = arith.constant 0 : i32
    %c0_i32_0 = arith.constant 0 : i32
    %c0_i32_1 = arith.constant 0 : i32
    return %arg0, %c0_i32, %c0_i32_0 : i32, i32, i32
  }
  func.func @transform_1(%arg0: i32, %arg1: i32) -> (i32, i32, i32) {
    %c0_i32 = arith.constant 0 : i32
    %c0_i32_0 = arith.constant 0 : i32
    return %arg0, %arg1, %c0_i32 : i32, i32, i32
  }
  func.func @transform_2(%arg0: i32, %arg1: i32) -> (i32, i32) {
    %c0_i32 = arith.constant 0 : i32
    %c0_i32_0 = arith.constant 0 : i32
    %c0_i32_1 = arith.constant 0 : i32
    return %c0_i32, %c0_i32_0 : i32, i32
  }
  func.func @transform_3(%arg0: i32, %arg1: i32) -> (i32, i32) {
    %c0_i32 = arith.constant 0 : i32
    %c0_i32_0 = arith.constant 0 : i32
    %c0_i32_1 = arith.constant 0 : i32
    return %c0_i32, %c0_i32_0 : i32, i32
  }
  func.func @transform_4(%arg0: i32, %arg1: i32) -> (i32, i32, i32) {
    %c0_i32 = arith.constant 0 : i32
    %c0_i32_0 = arith.constant 0 : i32
    %c0_i32_1 = arith.constant 0 : i32
    %c0_i32_2 = arith.constant 0 : i32
    return %c0_i32, %c0_i32_0, %c0_i32_1 : i32, i32, i32
  }
  func.func @transform_5(%arg0: i32, %arg1: i32) -> (i32, i32, i32) {
    %c0_i32 = arith.constant 0 : i32
    %c0_i32_0 = arith.constant 0 : i32
    %c0_i32_1 = arith.constant 0 : i32
    %c0_i32_2 = arith.constant 0 : i32
    return %c0_i32, %c0_i32_0, %c0_i32_1 : i32, i32, i32
  }
  func.func @transform_6(%arg0: i32, %arg1: i32) -> (i32, i32, i32) {
    %c0_i32 = arith.constant 0 : i32
    %c0_i32_0 = arith.constant 0 : i32
    %c0_i32_1 = arith.constant 0 : i32
    %c0_i32_2 = arith.constant 0 : i32
    return %c0_i32, %c0_i32_0, %c0_i32_1 : i32, i32, i32
  }
  func.func @transform_7(%arg0: i32, %arg1: i32) -> (i32, i32) {
    %c0_i32 = arith.constant 0 : i32
    %c0_i32_0 = arith.constant 0 : i32
    %c0_i32_1 = arith.constant 0 : i32
    return %c0_i32, %c0_i32_0 : i32, i32
  }
  func.func @transform_8(%arg0: i32, %arg1: i32) -> (i32, i32) {
    %c0_i32 = arith.constant 0 : i32
    %c0_i32_0 = arith.constant 0 : i32
    %c0_i32_1 = arith.constant 0 : i32
    return %c0_i32, %c0_i32_0 : i32, i32
  }
  func.func @transform_9(%arg0: i32, %arg1: i32) -> (i32, i32) {
    %c0_i32 = arith.constant 0 : i32
    %c0_i32_0 = arith.constant 0 : i32
    %c0_i32_1 = arith.constant 0 : i32
    return %c0_i32, %c0_i32_0 : i32, i32
  }
  func.func @transform_10(%arg0: i32, %arg1: i32) -> (i32, i32) {
    %c0_i32 = arith.constant 0 : i32
    %c0_i32_0 = arith.constant 0 : i32
    %c0_i32_1 = arith.constant 0 : i32
    return %c0_i32, %c0_i32_0 : i32, i32
  }
  func.func @transform_11(%arg0: i32, %arg1: i32) -> (i32, i32, i32) {
    %c0_i32 = arith.constant 0 : i32
    %c0_i32_0 = arith.constant 0 : i32
    %c0_i32_1 = arith.constant 0 : i32
    %c0_i32_2 = arith.constant 0 : i32
    return %c0_i32, %c0_i32_0, %c0_i32_1 : i32, i32, i32
  }
  func.func @transform_12(%arg0: i32, %arg1: i32) -> (i32, i32) {
    %c0_i32 = arith.constant 0 : i32
    %c0_i32_0 = arith.constant 0 : i32
    %c0_i32_1 = arith.constant 0 : i32
    return %c0_i32, %c0_i32_0 : i32, i32
  }
  func.func @transform_13(%arg0: i32, %arg1: i32) -> (i32, i32) {
    %c0_i32 = arith.constant 0 : i32
    %c0_i32_0 = arith.constant 0 : i32
    %c0_i32_1 = arith.constant 0 : i32
    return %c0_i32, %c0_i32_0 : i32, i32
  }
  func.func @transform_14(%arg0: i32, %arg1: i32) -> (i32, i32) {
    %c0_i32 = arith.constant 0 : i32
    %c0_i32_0 = arith.constant 0 : i32
    %c0_i32_1 = arith.constant 0 : i32
    return %c0_i32, %c0_i32_0 : i32, i32
  }
  func.func @transform_15(%arg0: i32, %arg1: i32) -> (i32, i32, i32) {
    %c0_i32 = arith.constant 0 : i32
    %c0_i32_0 = arith.constant 0 : i32
    %c0_i32_1 = arith.constant 0 : i32
    %c0_i32_2 = arith.constant 0 : i32
    return %c0_i32, %c0_i32_0, %c0_i32_1 : i32, i32, i32
  }
  func.func @transform_16(%arg0: i32, %arg1: i32) -> (i32, i32, i32) {
    %c0_i32 = arith.constant 0 : i32
    %c0_i32_0 = arith.constant 0 : i32
    %c0_i32_1 = arith.constant 0 : i32
    %c0_i32_2 = arith.constant 0 : i32
    return %c0_i32, %c0_i32_0, %c0_i32_1 : i32, i32, i32
  }
  func.func @transform_17(%arg0: i32, %arg1: i32) -> (i32, i32, i32) {
    %c0_i32 = arith.constant 0 : i32
    %c0_i32_0 = arith.constant 0 : i32
    %c0_i32_1 = arith.constant 0 : i32
    %c0_i32_2 = arith.constant 0 : i32
    return %c0_i32, %c0_i32_0, %c0_i32_1 : i32, i32, i32
  }
  func.func @transform_18(%arg0: i32, %arg1: i32) -> (i32, i32) {
    %c0_i32 = arith.constant 0 : i32
    %c0_i32_0 = arith.constant 0 : i32
    %c0_i32_1 = arith.constant 0 : i32
    return %c0_i32, %c0_i32_0 : i32, i32
  }
  func.func @transform_19(%arg0: i32, %arg1: i32) -> (i32, i32, i32) {
    %c0_i32 = arith.constant 0 : i32
    %c0_i32_0 = arith.constant 0 : i32
    return %arg0, %arg1, %c0_i32 : i32, i32, i32
  }
}

</mosaic_0001>

<llo_original>
// kernel: tpu_custom_call.1
$region0: #{tpu_custom_call.1}
  #allocation0 [shape = 'u32[]', space=smem, size = 0x4, offset = 0x4, fixed_abs, tag = 'smem constant byte address 0x4 - core index']
  #allocation1 [shape = 'u32[144,128]{1,0:T(1,128)}', space=vmem, size = 0x12000, scoped, tag = 'internal scratch']
  #allocation2 [shape = 'bf16[4,8,8]{2,1,0:T(8,128)(2,1)}', space=vmem, size = 0x2000, scoped, tag = 'scratch operand']
  #allocation3 [shape = 'bf16[4,8,8]{2,1,0:T(8,128)(2,1)}', space=vmem, size = 0x2000, scoped, tag = 'scratch operand']
  %s0 = inlined_call_operand.hbm [shape: f32[2,8,32], index: 0, kind: input, shape index: {}]
  %s1 = inlined_call_operand.hbm [shape: f32[2,8,8], index: 1, kind: input, shape index: {}]
  %s2 = inlined_call_operand.hbm [shape: f32[1,32], index: 2, kind: input, shape index: {}]
  %s3 = inlined_call_operand.hbm [shape: f32[1,32], index: 3, kind: input, shape index: {}]
  %s4 = inlined_call_operand.hbm [shape: bf16[4,32,8], index: 4, kind: input, shape index: {}]
  %s5 = inlined_call_operand.hbm [shape: bf16[4,32,8], index: 5, kind: input, shape index: {}]
  %s6 = inlined_call_operand.hbm [shape: bf16[4,32,8], index: 6, kind: input, shape index: {}]
  %s7 = inlined_call_operand.hbm [shape: f32[1,8], index: 7, kind: input, shape index: {}]
  %s8 = inlined_call_operand.hbm [shape: f32[1,8], index: 8, kind: input, shape index: {}]
  %s9 = inlined_call_operand.hbm [shape: f32[1,8], index: 9, kind: input, shape index: {}]
  %s10 = inlined_call_operand.hbm [shape: f32[1,8], index: 10, kind: input, shape index: {}]
  %s11 = inlined_call_operand.hbm [shape: bf16[4,8,32], index: 11, kind: input, shape index: {}]
  %s12 = inlined_call_operand.hbm [shape: f32[1,32], index: 12, kind: input, shape index: {}]
  %s13 = inlined_call_operand.hbm [shape: f32[1,32], index: 13, kind: input, shape index: {}]
  %s14 = inlined_call_operand.hbm [shape: f32[1,32], index: 14, kind: input, shape index: {}]
  %s15 = inlined_call_operand.hbm [shape: bf16[1,32,128], index: 15, kind: input, shape index: {}]
  %s16 = inlined_call_operand.hbm [shape: f32[1,1,128], index: 16, kind: input, shape index: {}]
  %s17 = inlined_call_operand.hbm [shape: bf16[1,128,32], index: 17, kind: input, shape index: {}]
  %s18 = inlined_call_operand.hbm [shape: f32[1,32], index: 18, kind: input, shape index: {}]
  %s19 = inlined_call_operand.hbm [shape: f32[2,8,32], index: 19, kind: output, shape index: {}]
  %s20 = sld [smem:[#allocation0]]
  $region203: #{tpu_custom_call.1} parent=0
    _
  %s22 = ssub.s32 1, %s20
  %s23 = scalar_select 0, %s22, %s20
  $region1: #{tpu_custom_call.1} parent=0
    #allocation4 [shape = 'u8[8192]{0}', space=vmem, size = 0x2000, scoped, tag = 'input window, operand 0']
    #allocation5 [shape = 's32[2]{0}', space=sflag, size = 0x8, scoped, tag = 'scoped memory for tpu_custom_call.1']
    #allocation6 [shape = 's32[2]{0}', space=sflag, size = 0x8, scoped, tag = 'scoped memory for tpu_custom_call.1']
    #allocation7 [shape = 'u8[8192]{0}', space=vmem, size = 0x2000, scoped, tag = 'input window, operand 1']
    #allocation8 [shape = 's32[2]{0}', space=sflag, size = 0x8, scoped, tag = 'scoped memory for tpu_custom_call.1']
    #allocation9 [shape = 'u8[512]{0}', space=vmem, size = 0x400, scoped, tag = 'input window, operand 2, single buffered']
    #allocation10 [shape = 'u8[512]{0}', space=vmem, size = 0x400, scoped, tag = 'input window, operand 3, single buffered']
    #allocation11 [shape = 's32[1]{0}', space=sflag, size = 0x4, scoped, tag = 'scoped memory for tpu_custom_call.1']
    #allocation12 [shape = 'u8[32768]{0}', space=vmem, size = 0x8000, scoped, tag = 'input window, operand 4, single buffered']
    #allocation13 [shape = 'u8[32768]{0}', space=vmem, size = 0x8000, scoped, tag = 'input window, operand 5, single buffered']
    #allocation14 [shape = 's32[1]{0}', space=sflag, size = 0x4, scoped, tag = 'scoped memory for tpu_custom_call.1']
    #allocation15 [shape = 'u8[32768]{0}', space=vmem, size = 0x8000, scoped, tag = 'input window, operand 6, single buffered']
    #allocation16 [shape = 'u8[512]{0}', space=vmem, size = 0x400, scoped, tag = 'input window, operand 7, single buffered']
    #allocation17 [shape = 's32[1]{0}', space=sflag, size = 0x4, scoped, tag = 'scoped memory for tpu_custom_call.1']
    #allocation18 [shape = 'u8[512]{0}', space=vmem, size = 0x400, scoped, tag = 'input window, operand 8, single buffered']
    #allocation19 [shape = 'u8[512]{0}', space=vmem, size = 0x400, scoped, tag = 'input window, operand 9, single buffered']
    #allocation20 [shape = 's32[1]{0}', space=sflag, size = 0x4, scoped, tag = 'scoped memory for tpu_custom_call.1']
    #allocation21 [shape = 'u8[512]{0}', space=vmem, size = 0x400, scoped, tag = 'input window, operand 10, single buffered']
    #allocation22 [shape = 'u8[8192]{0}', space=vmem, size = 0x2000, scoped, tag = 'input window, operand 11, single buffered']
    #allocation23 [shape = 's32[1]{0}', space=sflag, size = 0x4, scoped, tag = 'scoped memory for tpu_custom_call.1']
    #allocation24 [shape = 'u8[512]{0}', space=vmem, size = 0x400, scoped, tag = 'input window, operand 12, single buffered']
    #allocation25 [shape = 'u8[512]{0}', space=vmem, size = 0x400, scoped, tag = 'input window, operand 13, single buffered']
    #allocation26 [shape = 's32[1]{0}', space=sflag, size = 0x4, scoped, tag = 'scoped memory for tpu_custom_call.1']
    #allocation27 [shape = 'u8[512]{0}', space=vmem, size = 0x400, scoped, tag = 'input window, operand 14, single buffered']
    #allocation28 [shape = 'u8[8192]{0}', space=vmem, size = 0x2000, scoped, tag = 'input window, operand 15, single buffered']
    #allocation29 [shape = 's32[1]{0}', space=sflag, size = 0x4, scoped, tag = 'scoped memory for tpu_custom_call.1']
    #allocation30 [shape = 'u8[512]{0}', space=vmem, size = 0x400, scoped, tag = 'input window, operand 16, single buffered']
    #allocation31 [shape = 'u8[32768]{0}', space=vmem, size = 0x8000, scoped, tag = 'input window, operand 17, single buffered']
    #allocation32 [shape = 's32[1]{0}', space=sflag, size = 0x4, scoped, tag = 'scoped memory for tpu_custom_call.1']
    #allocation33 [shape = 'u8[512]{0}', space=vmem, size = 0x400, scoped, tag = 'input window, operand 18, single buffered']
    #allocation34 [shape = 'u8[8192]{0}', space=vmem, size = 0x2000, scoped, tag = 'output window, operand 0']
    %24 = vsyncpa [#allocation5], 0
    %s25 = scalar_lea.sflag [#allocation5], 1
    %26 = vsyncpa %s25, 0
    %27 = vsyncpa [#allocation8], 0
    %s28 = scalar_lea.sflag [#allocation8], 1
    %29 = vsyncpa %s28, 0
    %30 = vsyncpa [#allocation11], 0
    %31 = vsyncpa [#allocation14], 0
    %32 = vsyncpa [#allocation17], 0
    %33 = vsyncpa [#allocation20], 0
    %34 = vsyncpa [#allocation23], 0
    %35 = vsyncpa [#allocation26], 0
    %36 = vsyncpa [#allocation29], 0
    %37 = vsyncpa [#allocation32], 0
    %38 = vsyncpa [#allocation6], 0
    %s39 = scalar_lea.sflag [#allocation6], 1
    %40 = vsyncpa %s39, 0
    loop: start=0, step=1, limit=4
    $region2: #{tpu_custom_call.1} parent=1 // loop_pre_header
      _
    $region3: #{tpu_custom_call.1} parent=1 // loop_header
      %s42 = sphi 0, %s46
      %p43 = scmp.ge.s32.totalorder %s42, 4
      %s49 = sphi 0, %s61
      %s50 = sphi 0, %s57
      %s51 = sphi 0, %s49
      %s52 = sphi 0, %s50
      %s53 = sphi 0, %s51
      %s54 = sphi 0, %s52
      %s64 = sphi 0, %s66
      %s67 = sphi 0, %s64
      %s68 = sphi 0, %s67
      %s84 = sphi 0, %s68
      %s92 = sphi 0, %s94
      %s95 = sphi 0, %s92
      %s96 = sphi 0, %s95
      %s112 = sphi 0, %s96
      %s116 = sphi 0, %s116
      %s118 = sphi 0, %s116
      %s119 = sphi 0, %s118
      %s133 = sphi 0, %s119
      %s137 = sphi 0, %s137
      %s139 = sphi 0, %s137
      %s140 = sphi 0, %s139
      %s154 = sphi 0, %s140
      %s158 = sphi 0, %s158
      %s160 = sphi 0, %s158
      %s161 = sphi 0, %s160
      %s175 = sphi 0, %s161
      %s179 = sphi 0, %s179
      %s181 = sphi 0, %s179
      %s182 = sphi 0, %s181
      %s196 = sphi 0, %s182
      %s200 = sphi 0, %s200
      %s202 = sphi 0, %s200
      %s203 = sphi 0, %s202
      %s217 = sphi 0, %s203
      %s221 = sphi 0, %s221
      %s223 = sphi 0, %s221
      %s224 = sphi 0, %s223
      %s238 = sphi 0, %s224
      %s242 = sphi 0, %s242
      %s244 = sphi 0, %s242
      %s245 = sphi 0, %s244
      %s259 = sphi 0, %s245
      %s263 = sphi 0, %s263
      %s265 = sphi 0, %s263
      %s266 = sphi 0, %s265
      %s280 = sphi 0, %s266
      %s284 = sphi 0, %s284
      %s286 = sphi 0, %s284
      %s287 = sphi 0, %s286
      %s301 = sphi 0, %s287
      %s305 = sphi 0, %s305
      %s307 = sphi 0, %s305
      %s308 = sphi 0, %s307
      %s322 = sphi 0, %s308
      %s326 = sphi 0, %s326
      %s328 = sphi 0, %s326
      %s329 = sphi 0, %s328
      %s343 = sphi 0, %s329
      %s347 = sphi 0, %s347
      %s349 = sphi 0, %s347
      %s350 = sphi 0, %s349
      %s364 = sphi 0, %s350
      %s368 = sphi 0, %s368
      %s370 = sphi 0, %s368
      %s371 = sphi 0, %s370
      %s385 = sphi 0, %s371
      %s389 = sphi 0, %s389
      %s391 = sphi 0, %s389
      %s392 = sphi 0, %s391
      %s406 = sphi 0, %s392
      %s410 = sphi 0, %s410
      %s412 = sphi 0, %s410
      %s413 = sphi 0, %s412
      %s427 = sphi 0, %s413
      %s431 = sphi 0, %s431
      %s433 = sphi 0, %s431
      %s434 = sphi 0, %s433
      %s448 = sphi 0, %s434
      %s452 = sphi 0, %s452
      %s454 = sphi 0, %s452
      %s455 = sphi 0, %s454
      %s469 = sphi 0, %s455
      %s477 = sphi 0, %s479
      %s480 = sphi 0, %s477
      %s481 = sphi 0, %s480
      %s497 = sphi 0, %s481
    $region4: #{tpu_custom_call.1} parent=1 // loop_header_branch
      %45 = sbr.rel (%p43) target = $region8
    $region5: #{tpu_custom_call.1} parent=1 // loop_body
      %s47 = ssub.s32 %s42, 1
      %s48 = ssub.s32 %s42, 2
      %s55 = sadd.s32 1, %s50
      %p56 = scmp.ge.s32.totalorder %s55, 1
      %s57 = scalar_select %p56, 0, %s55
      %s58 = sadd.s32 1, %s49
      %s59 = scalar_select %p56, %s58, %s49
      %p60 = scmp.ge.s32.totalorder %s59, 2
      %s61 = scalar_select %p60, 0, %s59
      %s62 = ssub.s32 %s49, %s61
      %p63 = scmp.eq.s32.totalorder %s62, 0
      %s65 = sadd.s32 %s64, 1
      %s66 = scalar_select %p63, %s64, %s65
      %p69 = pneg %p63
      %p70 = scmp.eq.s32.totalorder %s42, 1
      %p71 = por %p69, %p70
      %p72 = scmp.ne.s32.totalorder %s64, %s67
      %p73 = scmp.eq.s32.totalorder %s42, 0
      %p74 = por %p72, %p73
      %p75 = scmp.ne.s32.totalorder %s64, %s67
      %p76 = scmp.eq.s32.totalorder %s47, 1
      %p77 = por %p75, %p76
      %p78 = scmp.ne.s32.totalorder %s67, %s68
      %p79 = scmp.eq.s32.totalorder %s47, 0
      %p80 = por %p78, %p79
      %p81 = scmp.ne.s32.totalorder %s67, %s68
      %p82 = scmp.eq.s32.totalorder %s48, 1
      %p83 = por %p81, %p82
      %p85 = scmp.ne.s32.totalorder %s68, %s84
      %p86 = scmp.eq.s32.totalorder %s48, 0
      %p87 = por %p85, %p86
      %s88 = ssub.s32 %s49, %s61
      %s89 = ssub.s32 %s50, %s57
      %s90 = sor.u32 %s88, %s89
      %p91 = scmp.eq.s32.totalorder %s90, 0
      %s93 = sadd.s32 %s92, 1
      %s94 = scalar_select %p91, %s92, %s93
      %p97 = pneg %p91
      %p98 = scmp.eq.s32.totalorder %s42, 1
      %p99 = por %p97, %p98
      %p100 = scmp.ne.s32.totalorder %s92, %s95
      %p101 = scmp.eq.s32.totalorder %s42, 0
      %p102 = por %p100, %p101
      %p103 = scmp.ne.s32.totalorder %s92, %s95
      %p104 = scmp.eq.s32.totalorder %s47, 1
      %p105 = por %p103, %p104
      %p106 = scmp.ne.s32.totalorder %s95, %s96
      %p107 = scmp.eq.s32.totalorder %s47, 0
      %p108 = por %p106, %p107
      %p109 = scmp.ne.s32.totalorder %s95, %s96
      %p110 = scmp.eq.s32.totalorder %s48, 1
      %p111 = por %p109, %p110
      %p113 = scmp.ne.s32.totalorder %s96, %s112
      %p114 = scmp.eq.s32.totalorder %s48, 0
      %p115 = por %p113, %p114
      %s117 = sadd.s32 %s116, 1
      %p120 = scmp.eq.s32.totalorder %s42, 1
      %p121 = scmp.ne.s32.totalorder %s116, %s118
      %p122 = scmp.eq.s32.totalorder %s42, 0
      %p123 = por %p121, %p122
      %p124 = scmp.ne.s32.totalorder %s116, %s118
      %p125 = scmp.eq.s32.totalorder %s47, 1
      %p126 = por %p124, %p125
      %p127 = scmp.ne.s32.totalorder %s118, %s119
      %p128 = scmp.eq.s32.totalorder %s47, 0
      %p129 = por %p127, %p128
      %p130 = scmp.ne.s32.totalorder %s118, %s119
      %p131 = scmp.eq.s32.totalorder %s48, 1
      %p132 = por %p130, %p131
      %p134 = scmp.ne.s32.totalorder %s119, %s133
      %p135 = scmp.eq.s32.totalorder %s48, 0
      %p136 = por %p134, %p135
      %s138 = sadd.s32 %s137, 1
      %p141 = scmp.eq.s32.totalorder %s42, 1
      %p142 = scmp.ne.s32.totalorder %s137, %s139
      %p143 = scmp.eq.s32.totalorder %s42, 0
      %p144 = por %p142, %p143
      %p145 = scmp.ne.s32.totalorder %s137, %s139
      %p146 = scmp.eq.s32.totalorder %s47, 1
      %p147 = por %p145, %p146
      %p148 = scmp.ne.s32.totalorder %s139, %s140
      %p149 = scmp.eq.s32.totalorder %s47, 0
      %p150 = por %p148, %p149
      %p151 = scmp.ne.s32.totalorder %s139, %s140
      %p152 = scmp.eq.s32.totalorder %s48, 1
      %p153 = por %p151, %p152
      %p155 = scmp.ne.s32.totalorder %s140, %s154
      %p156 = scmp.eq.s32.totalorder %s48, 0
      %p157 = por %p155, %p156
      %s159 = sadd.s32 %s158, 1
      %p162 = scmp.eq.s32.totalorder %s42, 1
      %p163 = scmp.ne.s32.totalorder %s158, %s160
      %p164 = scmp.eq.s32.totalorder %s42, 0
      %p165 = por %p163, %p164
      %p166 = scmp.ne.s32.totalorder %s158, %s160
      %p167 = scmp.eq.s32.totalorder %s47, 1
      %p168 = por %p166, %p167
      %p169 = scmp.ne.s32.totalorder %s160, %s161
      %p170 = scmp.eq.s32.totalorder %s47, 0
      %p171 = por %p169, %p170
      %p172 = scmp.ne.s32.totalorder %s160, %s161
      %p173 = scmp.eq.s32.totalorder %s48, 1
      %p174 = por %p172, %p173
      %p176 = scmp.ne.s32.totalorder %s161, %s175
      %p177 = scmp.eq.s32.totalorder %s48, 0
      %p178 = por %p176, %p177
      %s180 = sadd.s32 %s179, 1
      %p183 = scmp.eq.s32.totalorder %s42, 1
      %p184 = scmp.ne.s32.totalorder %s179, %s181
      %p185 = scmp.eq.s32.totalorder %s42, 0
      %p186 = por %p184, %p185
      %p187 = scmp.ne.s32.totalorder %s179, %s181
      %p188 = scmp.eq.s32.totalorder %s47, 1
      %p189 = por %p187, %p188
      %p190 = scmp.ne.s32.totalorder %s181, %s182
      %p191 = scmp.eq.s32.totalorder %s47, 0
      %p192 = por %p190, %p191
      %p193 = scmp.ne.s32.totalorder %s181, %s182
      %p194 = scmp.eq.s32.totalorder %s48, 1
      %p195 = por %p193, %p194
      %p197 = scmp.ne.s32.totalorder %s182, %s196
      %p198 = scmp.eq.s32.totalorder %s48, 0
      %p199 = por %p197, %p198
      %s201 = sadd.s32 %s200, 1
      %p204 = scmp.eq.s32.totalorder %s42, 1
      %p205 = scmp.ne.s32.totalorder %s200, %s202
      %p206 = scmp.eq.s32.totalorder %s42, 0
      %p207 = por %p205, %p206
      %p208 = scmp.ne.s32.totalorder %s200, %s202
      %p209 = scmp.eq.s32.totalorder %s47, 1
      %p210 = por %p208, %p209
      %p211 = scmp.ne.s32.totalorder %s202, %s203
      %p212 = scmp.eq.s32.totalorder %s47, 0
      %p213 = por %p211, %p212
      %p214 = scmp.ne.s32.totalorder %s202, %s203
      %p215 = scmp.eq.s32.totalorder %s48, 1
      %p216 = por %p214, %p215
      %p218 = scmp.ne.s32.totalorder %s203, %s217
      %p219 = scmp.eq.s32.totalorder %s48, 0
      %p220 = por %p218, %p219
      %s222 = sadd.s32 %s221, 1
      %p225 = scmp.eq.s32.totalorder %s42, 1
      %p226 = scmp.ne.s32.totalorder %s221, %s223
      %p227 = scmp.eq.s32.totalorder %s42, 0
      %p228 = por %p226, %p227
      %p229 = scmp.ne.s32.totalorder %s221, %s223
      %p230 = scmp.eq.s32.totalorder %s47, 1
      %p231 = por %p229, %p230
      %p232 = scmp.ne.s32.totalorder %s223, %s224
      %p233 = scmp.eq.s32.totalorder %s47, 0
      %p234 = por %p232, %p233
      %p235 = scmp.ne.s32.totalorder %s223, %s224
      %p236 = scmp.eq.s32.totalorder %s48, 1
      %p237 = por %p235, %p236
      %p239 = scmp.ne.s32.totalorder %s224, %s238
      %p240 = scmp.eq.s32.totalorder %s48, 0
      %p241 = por %p239, %p240
      %s243 = sadd.s32 %s242, 1
      %p246 = scmp.eq.s32.totalorder %s42, 1
      %p247 = scmp.ne.s32.totalorder %s242, %s244
      %p248 = scmp.eq.s32.totalorder %s42, 0
      %p249 = por %p247, %p248
      %p250 = scmp.ne.s32.totalorder %s242, %s244
      %p251 = scmp.eq.s32.totalorder %s47, 1
      %p252 = por %p250, %p251
      %p253 = scmp.ne.s32.totalorder %s244, %s245
      %p254 = scmp.eq.s32.totalorder %s47, 0
      %p255 = por %p253, %p254
      %p256 = scmp.ne.s32.totalorder %s244, %s245
      %p257 = scmp.eq.s32.totalorder %s48, 1
      %p258 = por %p256, %p257
      %p260 = scmp.ne.s32.totalorder %s245, %s259
      %p261 = scmp.eq.s32.totalorder %s48, 0
      %p262 = por %p260, %p261
      %s264 = sadd.s32 %s263, 1
      %p267 = scmp.eq.s32.totalorder %s42, 1
      %p268 = scmp.ne.s32.totalorder %s263, %s265
      %p269 = scmp.eq.s32.totalorder %s42, 0
      %p270 = por %p268, %p269
      %p271 = scmp.ne.s32.totalorder %s263, %s265
      %p272 = scmp.eq.s32.totalorder %s47, 1
      %p273 = por %p271, %p272
      %p274 = scmp.ne.s32.totalorder %s265, %s266
      %p275 = scmp.eq.s32.totalorder %s47, 0
      %p276 = por %p274, %p275
      %p277 = scmp.ne.s32.totalorder %s265, %s266
      %p278 = scmp.eq.s32.totalorder %s48, 1
      %p279 = por %p277, %p278
      %p281 = scmp.ne.s32.totalorder %s266, %s280
      %p282 = scmp.eq.s32.totalorder %s48, 0
      %p283 = por %p281, %p282
      %s285 = sadd.s32 %s284, 1
      %p288 = scmp.eq.s32.totalorder %s42, 1
      %p289 = scmp.ne.s32.totalorder %s284, %s286
      %p290 = scmp.eq.s32.totalorder %s42, 0
      %p291 = por %p289, %p290
      %p292 = scmp.ne.s32.totalorder %s284, %s286
      %p293 = scmp.eq.s32.totalorder %s47, 1
      %p294 = por %p292, %p293
      %p295 = scmp.ne.s32.totalorder %s286, %s287
      %p296 = scmp.eq.s32.totalorder %s47, 0
      %p297 = por %p295, %p296
      %p298 = scmp.ne.s32.totalorder %s286, %s287
      %p299 = scmp.eq.s32.totalorder %s48, 1
      %p300 = por %p298, %p299
      %p302 = scmp.ne.s32.totalorder %s287, %s301
      %p303 = scmp.eq.s32.totalorder %s48, 0
      %p304 = por %p302, %p303
      %s306 = sadd.s32 %s305, 1
      %p309 = scmp.eq.s32.totalorder %s42, 1
      %p310 = scmp.ne.s32.totalorder %s305, %s307
      %p311 = scmp.eq.s32.totalorder %s42, 0
      %p312 = por %p310, %p311
      %p313 = scmp.ne.s32.totalorder %s305, %s307
      %p314 = scmp.eq.s32.totalorder %s47, 1
      %p315 = por %p313, %p314
      %p316 = scmp.ne.s32.totalorder %s307, %s308
      %p317 = scmp.eq.s32.totalorder %s47, 0
      %p318 = por %p316, %p317
      %p319 = scmp.ne.s32.totalorder %s307, %s308
      %p320 = scmp.eq.s32.totalorder %s48, 1
      %p321 = por %p319, %p320
      %p323 = scmp.ne.s32.totalorder %s308, %s322
      %p324 = scmp.eq.s32.totalorder %s48, 0
      %p325 = por %p323, %p324
      %s327 = sadd.s32 %s326, 1
      %p330 = scmp.eq.s32.totalorder %s42, 1
      %p331 = scmp.ne.s32.totalorder %s326, %s328
      %p332 = scmp.eq.s32.totalorder %s42, 0
      %p333 = por %p331, %p332
      %p334 = scmp.ne.s32.totalorder %s326, %s328
      %p335 = scmp.eq.s32.totalorder %s47, 1
      %p336 = por %p334, %p335
      %p337 = scmp.ne.s32.totalorder %s328, %s329
      %p338 = scmp.eq.s32.totalorder %s47, 0
      %p339 = por %p337, %p338
      %p340 = scmp.ne.s32.totalorder %s328, %s329
      %p341 = scmp.eq.s32.totalorder %s48, 1
      %p342 = por %p340, %p341
      %p344 = scmp.ne.s32.totalorder %s329, %s343
      %p345 = scmp.eq.s32.totalorder %s48, 0
      %p346 = por %p344, %p345
      %s348 = sadd.s32 %s347, 1
      %p351 = scmp.eq.s32.totalorder %s42, 1
      %p352 = scmp.ne.s32.totalorder %s347, %s349
      %p353 = scmp.eq.s32.totalorder %s42, 0
      %p354 = por %p352, %p353
      %p355 = scmp.ne.s32.totalorder %s347, %s349
      %p356 = scmp.eq.s32.totalorder %s47, 1
      %p357 = por %p355, %p356
      %p358 = scmp.ne.s32.totalorder %s349, %s350
      %p359 = scmp.eq.s32.totalorder %s47, 0
      %p360 = por %p358, %p359
      %p361 = scmp.ne.s32.totalorder %s349, %s350
      %p362 = scmp.eq.s32.totalorder %s48, 1
      %p363 = por %p361, %p362
      %p365 = scmp.ne.s32.totalorder %s350, %s364
      %p366 = scmp.eq.s32.totalorder %s48, 0
      %p367 = por %p365, %p366
      %s369 = sadd.s32 %s368, 1
      %p372 = scmp.eq.s32.totalorder %s42, 1
      %p373 = scmp.ne.s32.totalorder %s368, %s370
      %p374 = scmp.eq.s32.totalorder %s42, 0
      %p375 = por %p373, %p374
      %p376 = scmp.ne.s32.totalorder %s368, %s370
      %p377 = scmp.eq.s32.totalorder %s47, 1
      %p378 = por %p376, %p377
      %p379 = scmp.ne.s32.totalorder %s370, %s371
      %p380 = scmp.eq.s32.totalorder %s47, 0
      %p381 = por %p379, %p380
      %p382 = scmp.ne.s32.totalorder %s370, %s371
      %p383 = scmp.eq.s32.totalorder %s48, 1
      %p384 = por %p382, %p383
      %p386 = scmp.ne.s32.totalorder %s371, %s385
      %p387 = scmp.eq.s32.totalorder %s48, 0
      %p388 = por %p386, %p387
      %s390 = sadd.s32 %s389, 1
      %p393 = scmp.eq.s32.totalorder %s42, 1
      %p394 = scmp.ne.s32.totalorder %s389, %s391
      %p395 = scmp.eq.s32.totalorder %s42, 0
      %p396 = por %p394, %p395
      %p397 = scmp.ne.s32.totalorder %s389, %s391
      %p398 = scmp.eq.s32.totalorder %s47, 1
      %p399 = por %p397, %p398
      %p400 = scmp.ne.s32.totalorder %s391, %s392
      %p401 = scmp.eq.s32.totalorder %s47, 0
      %p402 = por %p400, %p401
      %p403 = scmp.ne.s32.totalorder %s391, %s392
      %p404 = scmp.eq.s32.totalorder %s48, 1
      %p405 = por %p403, %p404
      %p407 = scmp.ne.s32.totalorder %s392, %s406
      %p408 = scmp.eq.s32.totalorder %s48, 0
      %p409 = por %p407, %p408
      %s411 = sadd.s32 %s410, 1
      %p414 = scmp.eq.s32.totalorder %s42, 1
      %p415 = scmp.ne.s32.totalorder %s410, %s412
      %p416 = scmp.eq.s32.totalorder %s42, 0
      %p417 = por %p415, %p416
      %p418 = scmp.ne.s32.totalorder %s410, %s412
      %p419 = scmp.eq.s32.totalorder %s47, 1
      %p420 = por %p418, %p419
      %p421 = scmp.ne.s32.totalorder %s412, %s413
      %p422 = scmp.eq.s32.totalorder %s47, 0
      %p423 = por %p421, %p422
      %p424 = scmp.ne.s32.totalorder %s412, %s413
      %p425 = scmp.eq.s32.totalorder %s48, 1
      %p426 = por %p424, %p425
      %p428 = scmp.ne.s32.totalorder %s413, %s427
      %p429 = scmp.eq.s32.totalorder %s48, 0
      %p430 = por %p428, %p429
      %s432 = sadd.s32 %s431, 1
      %p435 = scmp.eq.s32.totalorder %s42, 1
      %p436 = scmp.ne.s32.totalorder %s431, %s433
      %p437 = scmp.eq.s32.totalorder %s42, 0
      %p438 = por %p436, %p437
      %p439 = scmp.ne.s32.totalorder %s431, %s433
      %p440 = scmp.eq.s32.totalorder %s47, 1
      %p441 = por %p439, %p440
      %p442 = scmp.ne.s32.totalorder %s433, %s434
      %p443 = scmp.eq.s32.totalorder %s47, 0
      %p444 = por %p442, %p443
      %p445 = scmp.ne.s32.totalorder %s433, %s434
      %p446 = scmp.eq.s32.totalorder %s48, 1
      %p447 = por %p445, %p446
      %p449 = scmp.ne.s32.totalorder %s434, %s448
      %p450 = scmp.eq.s32.totalorder %s48, 0
      %p451 = por %p449, %p450
      %s453 = sadd.s32 %s452, 1
      %p456 = scmp.eq.s32.totalorder %s42, 1
      %p457 = scmp.ne.s32.totalorder %s452, %s454
      %p458 = scmp.eq.s32.totalorder %s42, 0
      %p459 = por %p457, %p458
      %p460 = scmp.ne.s32.totalorder %s452, %s454
      %p461 = scmp.eq.s32.totalorder %s47, 1
      %p462 = por %p460, %p461
      %p463 = scmp.ne.s32.totalorder %s454, %s455
      %p464 = scmp.eq.s32.totalorder %s47, 0
      %p465 = por %p463, %p464
      %p466 = scmp.ne.s32.totalorder %s454, %s455
      %p467 = scmp.eq.s32.totalorder %s48, 1
      %p468 = por %p466, %p467
      %p470 = scmp.ne.s32.totalorder %s455, %s469
      %p471 = scmp.eq.s32.totalorder %s48, 0
      %p472 = por %p470, %p471
      %s473 = ssub.s32 %s49, %s61
      %s474 = ssub.s32 %s50, %s57
      %s475 = sor.u32 %s473, %s474
      %p476 = scmp.eq.s32.totalorder %s475, 0
      %s478 = sadd.s32 %s477, 1
      %s479 = scalar_select %p476, %s477, %s478
      %p482 = pneg %p476
      %p483 = scmp.eq.s32.totalorder %s42, 1
      %p484 = por %p482, %p483
      %p485 = scmp.ne.s32.totalorder %s477, %s480
      %p486 = scmp.eq.s32.totalorder %s42, 0
      %p487 = por %p485, %p486
      %p488 = scmp.ne.s32.totalorder %s477, %s480
      %p489 = scmp.eq.s32.totalorder %s47, 1
      %p490 = por %p488, %p489
      %p491 = scmp.ne.s32.totalorder %s480, %s481
      %p492 = scmp.eq.s32.totalorder %s47, 0
      %p493 = por %p491, %p492
      %p494 = scmp.ne.s32.totalorder %s480, %s481
      %p495 = scmp.eq.s32.totalorder %s48, 1
      %p496 = por %p494, %p495
      %p498 = scmp.ne.s32.totalorder %s481, %s497
      %p499 = scmp.eq.s32.totalorder %s48, 0
      %p500 = por %p498, %p499
      %p501 = scmp.le.s32.totalorder 1, %s42
      %p502 = scmp.lt.s32.totalorder %s42, 3
      %p503 = pnand %p501, %p502
      %p504 = pneg %p503
      // Predicated region
      $region9: #{tpu_custom_call.1} parent=5 // pred_check
        _
      $region10: #{tpu_custom_call.1} parent=5 // pred_check_branch
        %506 = sbr.rel (%p503) target = $region12
      $region11: #{tpu_custom_call.1} parent=5 // pred_region
        %s507 = ssub.s32 %s42, 1
        // Predicated region
        $region13: #{tpu_custom_call.1} parent=11 // pred_check
          %p508 = pneg %p129
        $region14: #{tpu_custom_call.1} parent=11 // pred_check_branch
          %510 = sbr.rel (%p508) target = $region16
        $region15: #{tpu_custom_call.1} parent=11 // pred_region
          %s512 = ssub.s32 16, 16
          %513 = vsyncadd [#allocation8], %s512
          %s515 = sshll.u32 [#allocation9], 4
          %s516 = int_to_ptr.vmem [resolvable:$true] %s515
          %518 = dma.hbm_to_vmem [thread:$0]  %s2, 16, %s516, [#allocation8]
        $region16: #{tpu_custom_call.1} parent=11 // pred_fallthru
          _
        // Predicated region
        $region17: #{tpu_custom_call.1} parent=11 // pred_check
          %p519 = pneg %p150
        $region18: #{tpu_custom_call.1} parent=11 // pred_check_branch
          %521 = sbr.rel (%p519) target = $region20
        $region19: #{tpu_custom_call.1} parent=11 // pred_region
          %s523 = ssub.s32 16, 16
          %524 = vsyncadd [#allocation11], %s523
          %s526 = sshll.u32 [#allocation10], 4
          %s527 = int_to_ptr.vmem [resolvable:$true] %s526
          %529 = dma.hbm_to_vmem [thread:$0]  %s3, 16, %s527, [#allocation11]
        $region20: #{tpu_custom_call.1} parent=11 // pred_fallthru
          _
        // Predicated region
        $region21: #{tpu_custom_call.1} parent=11 // pred_check
          %p530 = pneg %p171
        $region22: #{tpu_custom_call.1} parent=11 // pred_check_branch
          %532 = sbr.rel (%p530) target = $region24
        $region23: #{tpu_custom_call.1} parent=11 // pred_region
          %s534 = ssub.s32 1024, 1024
          %535 = vsyncadd [#allocation11], %s534
          %s536 = sshll.u32 [#allocation12], 4
          %s537 = int_to_ptr.vmem [resolvable:$true] %s536
          %542 = dma.hbm_to_vmem [thread:$0]  %s4, 1024, %s537, [#allocation11], 64, 64, 4
        $region24: #{tpu_custom_call.1} parent=11 // pred_fallthru
          _
        // Predicated region
        $region25: #{tpu_custom_call.1} parent=11 // pred_check
          %p543 = pneg %p192
        $region26: #{tpu_custom_call.1} parent=11 // pred_check_branch
          %545 = sbr.rel (%p543) target = $region28
        $region27: #{tpu_custom_call.1} parent=11 // pred_region
          %s547 = ssub.s32 1024, 1024
          %548 = vsyncadd [#allocation14], %s547
          %s549 = sshll.u32 [#allocation13], 4
          %s550 = int_to_ptr.vmem [resolvable:$true] %s549
          %555 = dma.hbm_to_vmem [thread:$0]  %s5, 1024, %s550, [#allocation14], 64, 64, 4
        $region28: #{tpu_custom_call.1} parent=11 // pred_fallthru
          _
        // Predicated region
        $region29: #{tpu_custom_call.1} parent=11 // pred_check
          %p556 = pneg %p213
        $region30: #{tpu_custom_call.1} parent=11 // pred_check_branch
          %558 = sbr.rel (%p556) target = $region32
        $region31: #{tpu_custom_call.1} parent=11 // pred_region
          %s560 = ssub.s32 1024, 1024
          %561 = vsyncadd [#allocation14], %s560
          %s562 = sshll.u32 [#allocation15], 4
          %s563 = int_to_ptr.vmem [resolvable:$true] %s562
          %568 = dma.hbm_to_vmem [thread:$0]  %s6, 1024, %s563, [#allocation14], 64, 64, 4
        $region32: #{tpu_custom_call.1} parent=11 // pred_fallthru
          _
        // Predicated region
        $region33: #{tpu_custom_call.1} parent=11 // pred_check
          %p569 = pneg %p234
        $region34: #{tpu_custom_call.1} parent=11 // pred_check_branch
          %571 = sbr.rel (%p569) target = $region36
        $region35: #{tpu_custom_call.1} parent=11 // pred_region
          %s573 = ssub.s32 16, 16
          %574 = vsyncadd [#allocation17], %s573
          %s576 = sshll.u32 [#allocation16], 4
          %s577 = int_to_ptr.vmem [resolvable:$true] %s576
          %579 = dma.hbm_to_vmem [thread:$0]  %s7, 16, %s577, [#allocation17]
        $region36: #{tpu_custom_call.1} parent=11 // pred_fallthru
          _
        // Predicated region
        $region37: #{tpu_custom_call.1} parent=11 // pred_check
          %p580 = pneg %p255
        $region38: #{tpu_custom_call.1} parent=11 // pred_check_branch
          %582 = sbr.rel (%p580) target = $region40
        $region39: #{tpu_custom_call.1} parent=11 // pred_region
          %s584 = ssub.s32 16, 16
          %585 = vsyncadd [#allocation17], %s584
          %s587 = sshll.u32 [#allocation18], 4
          %s588 = int_to_ptr.vmem [resolvable:$true] %s587
          %590 = dma.hbm_to_vmem [thread:$0]  %s8, 16, %s588, [#allocation17]
        $region40: #{tpu_custom_call.1} parent=11 // pred_fallthru
          _
        // Predicated region
        $region41: #{tpu_custom_call.1} parent=11 // pred_check
          %p591 = pneg %p276
        $region42: #{tpu_custom_call.1} parent=11 // pred_check_branch
          %593 = sbr.rel (%p591) target = $region44
        $region43: #{tpu_custom_call.1} parent=11 // pred_region
          %s595 = ssub.s32 16, 16
          %596 = vsyncadd [#allocation20], %s595
          %s598 = sshll.u32 [#allocation19], 4
          %s599 = int_to_ptr.vmem [resolvable:$true] %s598
          %601 = dma.hbm_to_vmem [thread:$0]  %s9, 16, %s599, [#allocation20]
        $region44: #{tpu_custom_call.1} parent=11 // pred_fallthru
          _
        // Predicated region
        $region45: #{tpu_custom_call.1} parent=11 // pred_check
          %p602 = pneg %p297
        $region46: #{tpu_custom_call.1} parent=11 // pred_check_branch
          %604 = sbr.rel (%p602) target = $region48
        $region47: #{tpu_custom_call.1} parent=11 // pred_region
          %s606 = ssub.s32 16, 16
          %607 = vsyncadd [#allocation20], %s606
          %s609 = sshll.u32 [#allocation21], 4
          %s610 = int_to_ptr.vmem [resolvable:$true] %s609
          %612 = dma.hbm_to_vmem [thread:$0]  %s10, 16, %s610, [#allocation20]
        $region48: #{tpu_custom_call.1} parent=11 // pred_fallthru
          _
        // Predicated region
        $region49: #{tpu_custom_call.1} parent=11 // pred_check
          %p613 = pneg %p318
        $region50: #{tpu_custom_call.1} parent=11 // pred_check_branch
          %615 = sbr.rel (%p613) target = $region52
        $region51: #{tpu_custom_call.1} parent=11 // pred_region
          %s617 = ssub.s32 256, 256
          %618 = vsyncadd [#allocation23], %s617
          %s619 = sshll.u32 [#allocation22], 4
          %s620 = int_to_ptr.vmem [resolvable:$true] %s619
          %625 = dma.hbm_to_vmem [thread:$0]  %s11, 256, %s620, [#allocation23], 64, 64, 4
        $region52: #{tpu_custom_call.1} parent=11 // pred_fallthru
          _
        // Predicated region
        $region53: #{tpu_custom_call.1} parent=11 // pred_check
          %p626 = pneg %p339
        $region54: #{tpu_custom_call.1} parent=11 // pred_check_branch
          %628 = sbr.rel (%p626) target = $region56
        $region55: #{tpu_custom_call.1} parent=11 // pred_region
          %s630 = ssub.s32 16, 16
          %631 = vsyncadd [#allocation23], %s630
          %s633 = sshll.u32 [#allocation24], 4
          %s634 = int_to_ptr.vmem [resolvable:$true] %s633
          %636 = dma.hbm_to_vmem [thread:$0]  %s12, 16, %s634, [#allocation23]
        $region56: #{tpu_custom_call.1} parent=11 // pred_fallthru
          _
        // Predicated region
        $region57: #{tpu_custom_call.1} parent=11 // pred_check
          %p637 = pneg %p360
        $region58: #{tpu_custom_call.1} parent=11 // pred_check_branch
          %639 = sbr.rel (%p637) target = $region60
        $region59: #{tpu_custom_call.1} parent=11 // pred_region
          %s641 = ssub.s32 16, 16
          %642 = vsyncadd [#allocation26], %s641
          %s644 = sshll.u32 [#allocation25], 4
          %s645 = int_to_ptr.vmem [resolvable:$true] %s644
          %647 = dma.hbm_to_vmem [thread:$0]  %s13, 16, %s645, [#allocation26]
        $region60: #{tpu_custom_call.1} parent=11 // pred_fallthru
          _
        // Predicated region
        $region61: #{tpu_custom_call.1} parent=11 // pred_check
          %p648 = pneg %p381
        $region62: #{tpu_custom_call.1} parent=11 // pred_check_branch
          %650 = sbr.rel (%p648) target = $region64
        $region63: #{tpu_custom_call.1} parent=11 // pred_region
          %s652 = ssub.s32 16, 16
          %653 = vsyncadd [#allocation26], %s652
          %s655 = sshll.u32 [#allocation27], 4
          %s656 = int_to_ptr.vmem [resolvable:$true] %s655
          %658 = dma.hbm_to_vmem [thread:$0]  %s14, 16, %s656, [#allocation26]
        $region64: #{tpu_custom_call.1} parent=11 // pred_fallthru
          _
        // Predicated region
        $region65: #{tpu_custom_call.1} parent=11 // pred_check
          %p659 = pneg %p402
        $region66: #{tpu_custom_call.1} parent=11 // pred_check_branch
          %661 = sbr.rel (%p659) target = $region68
        $region67: #{tpu_custom_call.1} parent=11 // pred_region
          %s663 = ssub.s32 256, 256
          %664 = vsyncadd [#allocation29], %s663
          %s665 = sshll.u32 [#allocation28], 4
          %s666 = int_to_ptr.vmem [resolvable:$true] %s665
          %671 = dma.hbm_to_vmem [thread:$0]  %s15, 256, %s666, [#allocation29], 64, 64, 4
        $region68: #{tpu_custom_call.1} parent=11 // pred_fallthru
          _
        // Predicated region
        $region69: #{tpu_custom_call.1} parent=11 // pred_check
          %p672 = pneg %p423
        $region70: #{tpu_custom_call.1} parent=11 // pred_check_branch
          %674 = sbr.rel (%p672) target = $region72
        $region71: #{tpu_custom_call.1} parent=11 // pred_region
          %s676 = ssub.s32 16, 16
          %677 = vsyncadd [#allocation29], %s676
          %s679 = sshll.u32 [#allocation30], 4
          %s680 = int_to_ptr.vmem [resolvable:$true] %s679
          %682 = dma.hbm_to_vmem [thread:$0]  %s16, 16, %s680, [#allocation29]
        $region72: #{tpu_custom_call.1} parent=11 // pred_fallthru
          _
        // Predicated region
        $region73: #{tpu_custom_call.1} parent=11 // pred_check
          %p683 = pneg %p444
        $region74: #{tpu_custom_call.1} parent=11 // pred_check_branch
          %685 = sbr.rel (%p683) target = $region76
        $region75: #{tpu_custom_call.1} parent=11 // pred_region
          %s687 = ssub.s32 1024, 1024
          %688 = vsyncadd [#allocation32], %s687
          %s689 = sshll.u32 [#allocation31], 4
          %s690 = int_to_ptr.vmem [resolvable:$true] %s689
          %695 = dma.hbm_to_vmem [thread:$0]  %s17, 1024, %s690, [#allocation32], 64, 64, 4
        $region76: #{tpu_custom_call.1} parent=11 // pred_fallthru
          _
        // Predicated region
        $region77: #{tpu_custom_call.1} parent=11 // pred_check
          %p696 = pneg %p465
        $region78: #{tpu_custom_call.1} parent=11 // pred_check_branch
          %698 = sbr.rel (%p696) target = $region80
        $region79: #{tpu_custom_call.1} parent=11 // pred_region
          %s700 = ssub.s32 16, 16
          %701 = vsyncadd [#allocation32], %s700
          %s703 = sshll.u32 [#allocation33], 4
          %s704 = int_to_ptr.vmem [resolvable:$true] %s703
          %706 = dma.hbm_to_vmem [thread:$0]  %s18, 16, %s704, [#allocation32]
        $region80: #{tpu_custom_call.1} parent=11 // pred_fallthru
          _
      $region12: #{tpu_custom_call.1} parent=5 // pred_fallthru
        _
      %p707 = scmp.lt.s32.totalorder %s42, 2
      // Predicated region
      $region81: #{tpu_custom_call.1} parent=5 // pred_check
        %p708 = pneg %p707
      $region82: #{tpu_custom_call.1} parent=5 // pred_check_branch
        %710 = sbr.rel (%p708) target = $region84
      $region83: #{tpu_custom_call.1} parent=5 // pred_region
        // Predicated region
        $region85: #{tpu_custom_call.1} parent=83 // pred_check
          %p711 = pneg %p74
        $region86: #{tpu_custom_call.1} parent=83 // pred_check_branch
          %713 = sbr.rel (%p711) target = $region88
        $region87: #{tpu_custom_call.1} parent=83 // pred_region
          %s714 = sand.u32 %s64, 1
          %s715 = scalar_lea.sflag [#allocation5], %s714
          %s716 = sand.u32 %s64, 1
          %s717 = smul.addr %s716, 8
          %s718 = scalar_lea.vmem [#allocation4], %s717
          %s720 = ssub.s32 128, 128
          %721 = vsyncadd %s715, %s720
          %s722 = smul.addr %s49, 128
          %s723 = scalar_lea.hbm %s0, %s722
          %s725 = sshll.u32 %s718, 4
          %s726 = int_to_ptr.vmem [resolvable:$true] %s725
          %728 = dma.hbm_to_vmem [thread:$0]  %s723, 128, %s726, %s715
        $region88: #{tpu_custom_call.1} parent=83 // pred_fallthru
          _
        // Predicated region
        $region89: #{tpu_custom_call.1} parent=83 // pred_check
          %p729 = pneg %p102
        $region90: #{tpu_custom_call.1} parent=83 // pred_check_branch
          %731 = sbr.rel (%p729) target = $region92
        $region91: #{tpu_custom_call.1} parent=83 // pred_region
          %s732 = sand.u32 %s42, 1
          %s733 = scalar_lea.sflag [#allocation8], %s732
          %s734 = sand.u32 %s92, 1
          %s735 = smul.addr %s734, 8
          %s736 = scalar_lea.vmem [#allocation7], %s735
          %s738 = ssub.s32 128, 128
          %739 = vsyncadd %s733, %s738
          %s740 = sadd.s32 %s50, %s49
          %s741 = smul.addr %s740, 128
          %s742 = scalar_lea.hbm %s1, %s741
          %s744 = sshll.u32 %s736, 4
          %s745 = int_to_ptr.vmem [resolvable:$true] %s744
          %747 = dma.hbm_to_vmem [thread:$0]  %s742, 128, %s745, %s733
        $region92: #{tpu_custom_call.1} parent=83 // pred_fallthru
          _
      $region84: #{tpu_custom_call.1} parent=5 // pred_fallthru
        _
      %p748 = scmp.le.s32.totalorder 1, %s42
      %p749 = scmp.lt.s32.totalorder %s42, 3
      %p750 = pnand %p748, %p749
      %p751 = pneg %p750
      // Predicated region
      $region93: #{tpu_custom_call.1} parent=5 // pred_check
        _
      $region94: #{tpu_custom_call.1} parent=5 // pred_check_branch
        %753 = sbr.rel (%p750) target = $region96
      $region95: #{tpu_custom_call.1} parent=5 // pred_region
        %s754 = ssub.s32 %s42, 1
        %s755 = sand.u32 %s67, 1
        %s756 = scalar_lea.sflag [#allocation5], %s755
        %s757 = sand.u32 %s67, 1
        %s758 = smul.addr %s757, 8
        %s759 = scalar_lea.vmem [#allocation4], %s758
        // Predicated region
        $region97: #{tpu_custom_call.1} parent=95 // pred_check
          %p760 = pneg %p80
        $region98: #{tpu_custom_call.1} parent=95 // pred_check_branch
          %762 = sbr.rel (%p760) target = $region100
        $region99: #{tpu_custom_call.1} parent=95 // pred_region
          %763 = dma.done %s756, 128
        $region100: #{tpu_custom_call.1} parent=95 // pred_fallthru
          _
        %s764 = sand.u32 %s47, 1
        %s765 = scalar_lea.sflag [#allocation8], %s764
        %s766 = sand.u32 %s95, 1
        %s767 = smul.addr %s766, 8
        %s768 = scalar_lea.vmem [#allocation7], %s767
        // Predicated region
        $region101: #{tpu_custom_call.1} parent=95 // pred_check
          %p769 = pneg %p108
        $region102: #{tpu_custom_call.1} parent=95 // pred_check_branch
          %771 = sbr.rel (%p769) target = $region104
        $region103: #{tpu_custom_call.1} parent=95 // pred_region
          %772 = dma.done %s765, 128
        $region104: #{tpu_custom_call.1} parent=95 // pred_fallthru
          _
        // Predicated region
        $region105: #{tpu_custom_call.1} parent=95 // pred_check
          %p773 = pneg %p129
        $region106: #{tpu_custom_call.1} parent=95 // pred_check_branch
          %775 = sbr.rel (%p773) target = $region108
        $region107: #{tpu_custom_call.1} parent=95 // pred_region
          %776 = dma.done [#allocation8], 16
        $region108: #{tpu_custom_call.1} parent=95 // pred_fallthru
          _
        // Predicated region
        $region109: #{tpu_custom_call.1} parent=95 // pred_check
          %p777 = pneg %p150
        $region110: #{tpu_custom_call.1} parent=95 // pred_check_branch
          %779 = sbr.rel (%p777) target = $region112
        $region111: #{tpu_custom_call.1} parent=95 // pred_region
          %780 = dma.done [#allocation11], 16
        $region112: #{tpu_custom_call.1} parent=95 // pred_fallthru
          _
        // Predicated region
        $region113: #{tpu_custom_call.1} parent=95 // pred_check
          %p781 = pneg %p171
        $region114: #{tpu_custom_call.1} parent=95 // pred_check_branch
          %783 = sbr.rel (%p781) target = $region116
        $region115: #{tpu_custom_call.1} parent=95 // pred_region
          %784 = dma.done [#allocation11], 1024
        $region116: #{tpu_custom_call.1} parent=95 // pred_fallthru
          _
        // Predicated region
        $region117: #{tpu_custom_call.1} parent=95 // pred_check
          %p785 = pneg %p192
        $region118: #{tpu_custom_call.1} parent=95 // pred_check_branch
          %787 = sbr.rel (%p785) target = $region120
        $region119: #{tpu_custom_call.1} parent=95 // pred_region
          %788 = dma.done [#allocation14], 1024
        $region120: #{tpu_custom_call.1} parent=95 // pred_fallthru
          _
        // Predicated region
        $region121: #{tpu_custom_call.1} parent=95 // pred_check
          %p789 = pneg %p213
        $region122: #{tpu_custom_call.1} parent=95 // pred_check_branch
          %791 = sbr.rel (%p789) target = $region124
        $region123: #{tpu_custom_call.1} parent=95 // pred_region
          %792 = dma.done [#allocation14], 1024
        $region124: #{tpu_custom_call.1} parent=95 // pred_fallthru
          _
        // Predicated region
        $region125: #{tpu_custom_call.1} parent=95 // pred_check
          %p793 = pneg %p234
        $region126: #{tpu_custom_call.1} parent=95 // pred_check_branch
          %795 = sbr.rel (%p793) target = $region128
        $region127: #{tpu_custom_call.1} parent=95 // pred_region
          %796 = dma.done [#allocation17], 16
        $region128: #{tpu_custom_call.1} parent=95 // pred_fallthru
          _
        // Predicated region
        $region129: #{tpu_custom_call.1} parent=95 // pred_check
          %p797 = pneg %p255
        $region130: #{tpu_custom_call.1} parent=95 // pred_check_branch
          %799 = sbr.rel (%p797) target = $region132
        $region131: #{tpu_custom_call.1} parent=95 // pred_region
          %800 = dma.done [#allocation17], 16
        $region132: #{tpu_custom_call.1} parent=95 // pred_fallthru
          _
        // Predicated region
        $region133: #{tpu_custom_call.1} parent=95 // pred_check
          %p801 = pneg %p276
        $region134: #{tpu_custom_call.1} parent=95 // pred_check_branch
          %803 = sbr.rel (%p801) target = $region136
        $region135: #{tpu_custom_call.1} parent=95 // pred_region
          %804 = dma.done [#allocation20], 16
        $region136: #{tpu_custom_call.1} parent=95 // pred_fallthru
          _
        // Predicated region
        $region137: #{tpu_custom_call.1} parent=95 // pred_check
          %p805 = pneg %p297
        $region138: #{tpu_custom_call.1} parent=95 // pred_check_branch
          %807 = sbr.rel (%p805) target = $region140
        $region139: #{tpu_custom_call.1} parent=95 // pred_region
          %808 = dma.done [#allocation20], 16
        $region140: #{tpu_custom_call.1} parent=95 // pred_fallthru
          _
        // Predicated region
        $region141: #{tpu_custom_call.1} parent=95 // pred_check
          %p809 = pneg %p318
        $region142: #{tpu_custom_call.1} parent=95 // pred_check_branch
          %811 = sbr.rel (%p809) target = $region144
        $region143: #{tpu_custom_call.1} parent=95 // pred_region
          %812 = dma.done [#allocation23], 256
        $region144: #{tpu_custom_call.1} parent=95 // pred_fallthru
          _
        // Predicated region
        $region145: #{tpu_custom_call.1} parent=95 // pred_check
          %p813 = pneg %p339
        $region146: #{tpu_custom_call.1} parent=95 // pred_check_branch
          %815 = sbr.rel (%p813) target = $region148
        $region147: #{tpu_custom_call.1} parent=95 // pred_region
          %816 = dma.done [#allocation23], 16
        $region148: #{tpu_custom_call.1} parent=95 // pred_fallthru
          _
        // Predicated region
        $region149: #{tpu_custom_call.1} parent=95 // pred_check
          %p817 = pneg %p360
        $region150: #{tpu_custom_call.1} parent=95 // pred_check_branch
          %819 = sbr.rel (%p817) target = $region152
        $region151: #{tpu_custom_call.1} parent=95 // pred_region
          %820 = dma.done [#allocation26], 16
        $region152: #{tpu_custom_call.1} parent=95 // pred_fallthru
          _
        // Predicated region
        $region153: #{tpu_custom_call.1} parent=95 // pred_check
          %p821 = pneg %p381
        $region154: #{tpu_custom_call.1} parent=95 // pred_check_branch
          %823 = sbr.rel (%p821) target = $region156
        $region155: #{tpu_custom_call.1} parent=95 // pred_region
          %824 = dma.done [#allocation26], 16
        $region156: #{tpu_custom_call.1} parent=95 // pred_fallthru
          _
        // Predicated region
        $region157: #{tpu_custom_call.1} parent=95 // pred_check
          %p825 = pneg %p402
        $region158: #{tpu_custom_call.1} parent=95 // pred_check_branch
          %827 = sbr.rel (%p825) target = $region160
        $region159: #{tpu_custom_call.1} parent=95 // pred_region
          %828 = dma.done [#allocation29], 256
        $region160: #{tpu_custom_call.1} parent=95 // pred_fallthru
          _
        // Predicated region
        $region161: #{tpu_custom_call.1} parent=95 // pred_check
          %p829 = pneg %p423
        $region162: #{tpu_custom_call.1} parent=95 // pred_check_branch
          %831 = sbr.rel (%p829) target = $region164
        $region163: #{tpu_custom_call.1} parent=95 // pred_region
          %832 = dma.done [#allocation29], 16
        $region164: #{tpu_custom_call.1} parent=95 // pred_fallthru
          _
        // Predicated region
        $region165: #{tpu_custom_call.1} parent=95 // pred_check
          %p833 = pneg %p444
        $region166: #{tpu_custom_call.1} parent=95 // pred_check_branch
          %835 = sbr.rel (%p833) target = $region168
        $region167: #{tpu_custom_call.1} parent=95 // pred_region
          %836 = dma.done [#allocation32], 1024
        $region168: #{tpu_custom_call.1} parent=95 // pred_fallthru
          _
        // Predicated region
        $region169: #{tpu_custom_call.1} parent=95 // pred_check
          %p837 = pneg %p465
        $region170: #{tpu_custom_call.1} parent=95 // pred_check_branch
          %839 = sbr.rel (%p837) target = $region172
        $region171: #{tpu_custom_call.1} parent=95 // pred_region
          %840 = dma.done [#allocation32], 16
        $region172: #{tpu_custom_call.1} parent=95 // pred_fallthru
          _
        %s841 = sand.u32 %s67, 1
        %s842 = scalar_lea.sflag [#allocation5], %s841
        %s843 = sand.u32 %s67, 1
        %s844 = smul.addr %s843, 8
        %s845 = scalar_lea.vmem [#allocation4], %s844
        %p846 = pneg %p80
        %p847 = pneg %p77
        %s848 = sand.u32 %s47, 1
        %s849 = scalar_lea.sflag [#allocation8], %s848
        %s850 = sand.u32 %s95, 1
        %s851 = smul.addr %s850, 8
        %s852 = scalar_lea.vmem [#allocation7], %s851
        %p853 = pneg %p108
        %p854 = pneg %p105
        %p855 = pneg %p129
        %p856 = pneg %p126
        %p857 = pneg %p150
        %p858 = pneg %p147
        %p859 = pneg %p171
        %p860 = pneg %p168
        %p861 = pneg %p192
        %p862 = pneg %p189
        %p863 = pneg %p213
        %p864 = pneg %p210
        %p865 = pneg %p234
        %p866 = pneg %p231
        %p867 = pneg %p255
        %p868 = pneg %p252
        %p869 = pneg %p276
        %p870 = pneg %p273
        %p871 = pneg %p297
        %p872 = pneg %p294
        %p873 = pneg %p318
        %p874 = pneg %p315
        %p875 = pneg %p339
        %p876 = pneg %p336
        %p877 = pneg %p360
        %p878 = pneg %p357
        %p879 = pneg %p381
        %p880 = pneg %p378
        %p881 = pneg %p402
        %p882 = pneg %p399
        %p883 = pneg %p423
        %p884 = pneg %p420
        %p885 = pneg %p444
        %p886 = pneg %p441
        %p887 = pneg %p465
        %p888 = pneg %p462
        %p889 = pneg %p493
        %p890 = pneg %p490
        %s891 = sand.u32 %s480, 1
        %s892 = scalar_lea.sflag [#allocation6], %s891
        %s893 = sand.u32 %s480, 1
        %s894 = smul.addr %s893, 8
        %s895 = scalar_lea.vmem [#allocation34], %s894
        %p897 = scmp.eq.s32.totalorder %s52, 0
        // Predicated region
        $region173: #{tpu_custom_call.1} parent=95 // pred_check
          %p898 = pneg %p897
        $region174: #{tpu_custom_call.1} parent=95 // pred_check_branch
          %900 = sbr.rel (%p898) target = $region176
        $region175: #{tpu_custom_call.1} parent=95 // pred_region
          %v901 = vld [vmem:[%s759] sm:$0xff]
          %v902 = vld [vmem:[#allocation9] sm:$0x1]
          %v903 = vld [vmem:[#allocation10] sm:$0x1]
          %vm904 = vcmask 261120
          %v905 = vsel %vm904, %v901, 0.0
          %906 = vadd.xlane.f32.xlu0 %v905
          %v907 = vpop.xlane.xlu0 %906
          %v908 = vrcp.pop 32.0
          %v909 = vmul.f32 %v907, %v908
          %v910 = vsub.f32 %v901, %v909
          %v911 = vmul.f32 %v910, %v910
          %v912 = vsel %vm904, %v911, 0.0
          %913 = vadd.xlane.f32.xlu0 %v912
          %v914 = vpop.xlane.xlu0 %913
          %v915 = vmul.f32 %v914, %v908
          %v916 = vadd.f32 %v915, 1e-05
          %v917 = vrsqrt.pop %v916
          %v918 = vmul.f32 %v910, %v917
          %v920 = vlaneseq
          %v921 = vshrl.u32 %v920, 7
          %v922 = vsub.s32 0, %v921
          %v923 = vrot.slane %v902, %v922
          %v925 = vmul.f32 %v918, %v923
          %v927 = vlaneseq
          %v928 = vshrl.u32 %v927, 7
          %v929 = vsub.s32 0, %v928
          %v930 = vrot.slane %v903, %v929
          %v932 = vadd.f32 %v925, %v930
          %v933 = vpack.c.bf16 %v932, %v932
          %v934 = vld [vmem:[#allocation19] sm:$0x1]
          %v935 = vld [vmem:[#allocation21] sm:$0x1]
          loop: start=0, step=1, limit=4
          $region177: #{tpu_custom_call.1} parent=175 // loop_pre_header
            _
          $region178: #{tpu_custom_call.1} parent=175 // loop_header
            %s937 = sphi 0, %s941
            %p938 = scmp.ge.s32.totalorder %s937, 4
          $region179: #{tpu_custom_call.1} parent=175 // loop_header_branch
            %940 = sbr.rel (%p938) target = $region183
          $region180: #{tpu_custom_call.1} parent=175 // loop_body
            %s942 = smul.u32 %s937, 4
            %s943 = smul.addr %s942, 4
            %s944 = scalar_lea.vmem [#allocation13], %s943
            %v945 = vld [vmem:[%s944] sm:$0xf]
            %v946 = vld [vmem:[%s944 + $0x4] sm:$0xf]
            %v947 = vld [vmem:[%s944 + $0x8] sm:$0xf]
            %v948 = vld [vmem:[%s944 + $0xc] sm:$0xf]
            %v953 = vunpack.c.l.b16 %v945
            %v954 = vunpack.c.l.b16 %v946
            %v955 = vunpack.c.l.b16 %v947
            %v956 = vunpack.c.l.b16 %v948
            %v957 = vpack.c.b16 %v954, %v953
            %v958 = vpack.c.b16 %v956, %v955
            %v962 = vsel %vm904, %v933, 0
            %964 = vmatprep.subr.bf16.mxu0 0
            %965 = vmatpush1.bf16.msra.mxu0 %v957
            %966 = vmatprep.subr.bf16.mxu0 0
            %967 = vmatpush1.bf16.msra.mxu0 %v958
            %968 = vmatprep.subr.bf16.mxu0 0
            %969 = vmatpush1.bf16.msra.mxu0 0
            %970 = vmatprep.subr.bf16.mxu0 0
            %971 = vmatpush1.bf16.msra.mxu0 0
            %972 = vmatprep.subr.bf16.mxu0 0
            %973 = vmatpush1.bf16.msra.mxu0 0
            %974 = vmatprep.subr.bf16.mxu0 0
            %975 = vmatpush1.bf16.msra.mxu0 0
            %976 = vmatprep.subr.bf16.mxu0 0
            %977 = vmatpush1.bf16.msra.mxu0 0
            %978 = vmatprep.subr.bf16.mxu0 0
            %979 = vmatpush1.bf16.msra.mxu0 0
            %980 = vmatprep.subr.bf16.mxu0 0
            %981 = vmatpush1.bf16.msra.mxu0 0
            %982 = vmatprep.subr.bf16.mxu0 0
            %983 = vmatpush1.bf16.msra.mxu0 0
            %984 = vmatprep.subr.bf16.mxu0 0
            %985 = vmatpush1.bf16.msra.mxu0 0
            %986 = vmatprep.subr.bf16.mxu0 0
            %987 = vmatpush1.bf16.msra.mxu0 0
            %988 = vmatprep.subr.bf16.mxu0 0
            %989 = vmatpush1.bf16.msra.mxu0 0
            %990 = vmatprep.subr.bf16.mxu0 0
            %991 = vmatpush1.bf16.msra.mxu0 0
            %992 = vmatprep.subr.bf16.mxu0 0
            %993 = vmatpush1.bf16.msra.mxu0 0
            %994 = vmatprep.subr.bf16.mxu0 0
            %995 = vmatpush1.bf16.msra.mxu0 0
            %996 = vmatprep.mubr.bf16.mxu0 0
            %997 = vmatmul.mubr.bf16.gmra.mrb[0].mxu0 %v962
            %v998 = vpop.f32.mrb[0].mxu0
            %v999 = vadd.f32 0.0, %v998
            %v1000 = vpop.f32.mrb[0].mxu0
            %v1001 = vpop.f32.mrb[0].mxu0
            %v1002 = vpop.f32.mrb[0].mxu0
            %1003 = vdwg.mxu0
            %vm1004 = vcmask 64512
            %v1005 = vsel %vm1004, %v999, 0.0
            %1006 = vadd.xlane.f32.xlu0 %v1005
            %v1007 = vpop.xlane.xlu0 %1006
            %v1008 = vrcp.pop 8.0
            %v1009 = vmul.f32 %v1007, %v1008
            %v1010 = vsub.f32 %v999, %v1009
            %v1011 = vmul.f32 %v1010, %v1010
            %v1012 = vsel %vm1004, %v1011, 0.0
            %1013 = vadd.xlane.f32.xlu0 %v1012
            %v1014 = vpop.xlane.xlu0 %1013
            %v1015 = vmul.f32 %v1014, %v1008
            %v1016 = vadd.f32 %v1015, 1e-05
            %v1017 = vrsqrt.pop %v1016
            %v1018 = vmul.f32 %v1010, %v1017
            %v1020 = vlaneseq
            %v1021 = vshrl.u32 %v1020, 7
            %v1022 = vsub.s32 0, %v1021
            %v1023 = vrot.slane %v934, %v1022
            %v1025 = vmul.f32 %v1018, %v1023
            %v1027 = vlaneseq
            %v1028 = vshrl.u32 %v1027, 7
            %v1029 = vsub.s32 0, %v1028
            %v1030 = vrot.slane %v935, %v1029
            %v1032 = vadd.f32 %v1025, %v1030
            %v1033 = vpack.c.bf16 %v1032, %v1032
            %s1034 = smul.addr %s937, 4
            %s1035 = scalar_lea.vmem [#allocation2], %s1034
            %vm1036 = vcmask 60416
            %1037 = vst.msk [vmem:[%s1035] sm:$0xf] %vm1036, %v1033
            %s1038 = smul.addr %s942, 4
            %s1039 = scalar_lea.vmem [#allocation15], %s1038
            %v1040 = vld [vmem:[%s1039] sm:$0xf]
            %v1041 = vld [vmem:[%s1039 + $0x4] sm:$0xf]
            %v1042 = vld [vmem:[%s1039 + $0x8] sm:$0xf]
            %v1043 = vld [vmem:[%s1039 + $0xc] sm:$0xf]
            %v1048 = vunpack.c.l.b16 %v1040
            %v1049 = vunpack.c.l.b16 %v1041
            %v1050 = vunpack.c.l.b16 %v1042
            %v1051 = vunpack.c.l.b16 %v1043
            %v1052 = vpack.c.b16 %v1049, %v1048
            %v1053 = vpack.c.b16 %v1051, %v1050
            %1056 = vmatprep.subr.bf16.mxu0 0
            %1057 = vmatpush1.bf16.msra.mxu0 %v1052
            %1058 = vmatprep.subr.bf16.mxu0 0
            %1059 = vmatpush1.bf16.msra.mxu0 %v1053
            %1060 = vmatprep.subr.bf16.mxu0 0
            %1061 = vmatpush1.bf16.msra.mxu0 0
            %1062 = vmatprep.subr.bf16.mxu0 0
            %1063 = vmatpush1.bf16.msra.mxu0 0
            %1064 = vmatprep.subr.bf16.mxu0 0
            %1065 = vmatpush1.bf16.msra.mxu0 0
            %1066 = vmatprep.subr.bf16.mxu0 0
            %1067 = vmatpush1.bf16.msra.mxu0 0
            %1068 = vmatprep.subr.bf16.mxu0 0
            %1069 = vmatpush1.bf16.msra.mxu0 0
            %1070 = vmatprep.subr.bf16.mxu0 0
            %1071 = vmatpush1.bf16.msra.mxu0 0
            %1072 = vmatprep.subr.bf16.mxu0 0
            %1073 = vmatpush1.bf16.msra.mxu0 0
            %1074 = vmatprep.subr.bf16.mxu0 0
            %1075 = vmatpush1.bf16.msra.mxu0 0
            %1076 = vmatprep.subr.bf16.mxu0 0
            %1077 = vmatpush1.bf16.msra.mxu0 0
            %1078 = vmatprep.subr.bf16.mxu0 0
            %1079 = vmatpush1.bf16.msra.mxu0 0
            %1080 = vmatprep.subr.bf16.mxu0 0
            %1081 = vmatpush1.bf16.msra.mxu0 0
            %1082 = vmatprep.subr.bf16.mxu0 0
            %1083 = vmatpush1.bf16.msra.mxu0 0
            %1084 = vmatprep.subr.bf16.mxu0 0
            %1085 = vmatpush1.bf16.msra.mxu0 0
            %1086 = vmatprep.subr.bf16.mxu0 0
            %1087 = vmatpush1.bf16.msra.mxu0 0
            %1088 = vmatprep.mubr.bf16.mxu0 0
            %1089 = vmatmul.mubr.bf16.gmra.mrb[0].mxu0 %v962
            %v1090 = vpop.f32.mrb[0].mxu0
            %v1091 = vadd.f32 0.0, %v1090
            %v1092 = vpop.f32.mrb[0].mxu0
            %v1093 = vpop.f32.mrb[0].mxu0
            %v1094 = vpop.f32.mrb[0].mxu0
            %1095 = vdwg.mxu0
            %v1096 = vpack.c.bf16 %v1091, %v1091
            %s1097 = smul.addr %s937, 4
            %s1098 = scalar_lea.vmem [#allocation3], %s1097
            %1099 = vst.msk [vmem:[%s1098] sm:$0xf] %vm1036, %v1096
          $region181: #{tpu_custom_call.1} parent=175 // loop_footer
            %s941 = sadd.s32 1, %s937
          $region182: #{tpu_custom_call.1} parent=175 // loop_footer_branch
            %936 = sbr.rel target = $region178
          $region183: #{tpu_custom_call.1} parent=175 // loop_exit
            _
        $region176: #{tpu_custom_call.1} parent=95 // pred_fallthru
          _
        %s1100 = smul.u32 %s52, 8
        %s1101 = scalar_lea.vmem %s759, %s1100 [#allocation4]
        %v1102 = vld [vmem:[%s1101] sm:$0xff]
        %v1103 = vld [vmem:[#allocation9] sm:$0x1]
        %v1104 = vld [vmem:[#allocation10] sm:$0x1]
        %vm1105 = vcmask 261120
        %v1106 = vsel %vm1105, %v1102, 0.0
        %1107 = vadd.xlane.f32.xlu0 %v1106
        %v1108 = vpop.xlane.xlu0 %1107
        %v1109 = vrcp.pop 32.0
        %v1110 = vmul.f32 %v1108, %v1109
        %v1111 = vsub.f32 %v1102, %v1110
        %v1112 = vmul.f32 %v1111, %v1111
        %v1113 = vsel %vm1105, %v1112, 0.0
        %1114 = vadd.xlane.f32.xlu0 %v1113
        %v1115 = vpop.xlane.xlu0 %1114
        %v1116 = vmul.f32 %v1115, %v1109
        %v1117 = vadd.f32 %v1116, 1e-05
        %v1118 = vrsqrt.pop %v1117
        %v1119 = vmul.f32 %v1111, %v1118
        %v1121 = vlaneseq
        %v1122 = vshrl.u32 %v1121, 7
        %v1123 = vsub.s32 0, %v1122
        %v1124 = vrot.slane %v1103, %v1123
        %v1126 = vmul.f32 %v1119, %v1124
        %v1128 = vlaneseq
        %v1129 = vshrl.u32 %v1128, 7
        %v1130 = vsub.s32 0, %v1129
        %v1131 = vrot.slane %v1104, %v1130
        %v1133 = vadd.f32 %v1126, %v1131
        %v1134 = vpack.c.bf16 %v1133, %v1133
        %v1135 = vld [vmem:[%s768] sm:$0xff]
        %vm1136 = vcmp.ne.f32.partialorder %v1135, 0.0
        %v1137 = vld [vmem:[#allocation16] sm:$0x1]
        %v1138 = vld [vmem:[#allocation18] sm:$0x1]
        loop: start=0, step=1, limit=4
        $region184: #{tpu_custom_call.1} parent=95 // loop_pre_header
          _
        $region185: #{tpu_custom_call.1} parent=95 // loop_header
          %s1140 = sphi 0, %s1144
          %p1141 = scmp.ge.s32.totalorder %s1140, 4
          %v1145 = vphi 0.0, %v1400
        $region186: #{tpu_custom_call.1} parent=95 // loop_header_branch
          %1143 = sbr.rel (%p1141) target = $region190
        $region187: #{tpu_custom_call.1} parent=95 // loop_body
          %s1146 = smul.u32 %s1140, 4
          %s1147 = smul.addr %s1146, 4
          %s1148 = scalar_lea.vmem [#allocation12], %s1147
          %v1149 = vld [vmem:[%s1148] sm:$0xf]
          %v1150 = vld [vmem:[%s1148 + $0x4] sm:$0xf]
          %v1151 = vld [vmem:[%s1148 + $0x8] sm:$0xf]
          %v1152 = vld [vmem:[%s1148 + $0xc] sm:$0xf]
          %v1157 = vunpack.c.l.b16 %v1149
          %v1158 = vunpack.c.l.b16 %v1150
          %v1159 = vunpack.c.l.b16 %v1151
          %v1160 = vunpack.c.l.b16 %v1152
          %v1161 = vpack.c.b16 %v1158, %v1157
          %v1162 = vpack.c.b16 %v1160, %v1159
          %v1166 = vsel %vm1105, %v1134, 0
          %1168 = vmatprep.subr.bf16.mxu0 0
          %1169 = vmatpush1.bf16.msra.mxu0 %v1161
          %1170 = vmatprep.subr.bf16.mxu0 0
          %1171 = vmatpush1.bf16.msra.mxu0 %v1162
          %1172 = vmatprep.subr.bf16.mxu0 0
          %1173 = vmatpush1.bf16.msra.mxu0 0
          %1174 = vmatprep.subr.bf16.mxu0 0
          %1175 = vmatpush1.bf16.msra.mxu0 0
          %1176 = vmatprep.subr.bf16.mxu0 0
          %1177 = vmatpush1.bf16.msra.mxu0 0
          %1178 = vmatprep.subr.bf16.mxu0 0
          %1179 = vmatpush1.bf16.msra.mxu0 0
          %1180 = vmatprep.subr.bf16.mxu0 0
          %1181 = vmatpush1.bf16.msra.mxu0 0
          %1182 = vmatprep.subr.bf16.mxu0 0
          %1183 = vmatpush1.bf16.msra.mxu0 0
          %1184 = vmatprep.subr.bf16.mxu0 0
          %1185 = vmatpush1.bf16.msra.mxu0 0
          %1186 = vmatprep.subr.bf16.mxu0 0
          %1187 = vmatpush1.bf16.msra.mxu0 0
          %1188 = vmatprep.subr.bf16.mxu0 0
          %1189 = vmatpush1.bf16.msra.mxu0 0
          %1190 = vmatprep.subr.bf16.mxu0 0
          %1191 = vmatpush1.bf16.msra.mxu0 0
          %1192 = vmatprep.subr.bf16.mxu0 0
          %1193 = vmatpush1.bf16.msra.mxu0 0
          %1194 = vmatprep.subr.bf16.mxu0 0
          %1195 = vmatpush1.bf16.msra.mxu0 0
          %1196 = vmatprep.subr.bf16.mxu0 0
          %1197 = vmatpush1.bf16.msra.mxu0 0
          %1198 = vmatprep.subr.bf16.mxu0 0
          %1199 = vmatpush1.bf16.msra.mxu0 0
          %1200 = vmatprep.mubr.bf16.mxu0 0
          %1201 = vmatmul.mubr.bf16.gmra.mrb[0].mxu0 %v1166
          %v1202 = vpop.f32.mrb[0].mxu0
          %v1203 = vadd.f32 0.0, %v1202
          %v1204 = vpop.f32.mrb[0].mxu0
          %v1205 = vpop.f32.mrb[0].mxu0
          %v1206 = vpop.f32.mrb[0].mxu0
          %1207 = vdwg.mxu0
          %vm1208 = vcmask 64512
          %v1209 = vsel %vm1208, %v1203, 0.0
          %1210 = vadd.xlane.f32.xlu0 %v1209
          %v1211 = vpop.xlane.xlu0 %1210
          %v1212 = vrcp.pop 8.0
          %v1213 = vmul.f32 %v1211, %v1212
          %v1214 = vsub.f32 %v1203, %v1213
          %v1215 = vmul.f32 %v1214, %v1214
          %v1216 = vsel %vm1208, %v1215, 0.0
          %1217 = vadd.xlane.f32.xlu0 %v1216
          %v1218 = vpop.xlane.xlu0 %1217
          %v1219 = vmul.f32 %v1218, %v1212
          %v1220 = vadd.f32 %v1219, 1e-05
          %v1221 = vrsqrt.pop %v1220
          %v1222 = vmul.f32 %v1214, %v1221
          %v1224 = vlaneseq
          %v1225 = vshrl.u32 %v1224, 7
          %v1226 = vsub.s32 0, %v1225
          %v1227 = vrot.slane %v1137, %v1226
          %v1229 = vmul.f32 %v1222, %v1227
          %v1231 = vlaneseq
          %v1232 = vshrl.u32 %v1231, 7
          %v1233 = vsub.s32 0, %v1232
          %v1234 = vrot.slane %v1138, %v1233
          %v1236 = vadd.f32 %v1229, %v1234
          %v1237 = vpack.c.bf16 %v1236, %v1236
          %s1238 = smul.addr %s1140, 4
          %s1239 = scalar_lea.vmem [#allocation2], %s1238
          %v1240 = vld [vmem:[%s1239] sm:$0xf]
          %v1242 = vsel %vm1208, %v1237, 0
          %v1245 = vsel %vm1208, %v1240, 0
          %1247 = vmatprep.subr.bf16.mxu0 0
          %1248 = vmatpush1.bf16.xpose.msra.mxu0 %v1245
          %1249 = vmatprep.subr.bf16.mxu0 0
          %1250 = vmatpush1.bf16.xpose.msra.mxu0 0
          %1251 = vmatprep.subr.bf16.mxu0 0
          %1252 = vmatpush1.bf16.xpose.msra.mxu0 0
          %1253 = vmatprep.subr.bf16.mxu0 0
          %1254 = vmatpush1.bf16.xpose.msra.mxu0 0
          %1255 = vmatprep.subr.bf16.mxu0 0
          %1256 = vmatpush1.bf16.xpose.msra.mxu0 0
          %1257 = vmatprep.subr.bf16.mxu0 0
          %1258 = vmatpush1.bf16.xpose.msra.mxu0 0
          %1259 = vmatprep.subr.bf16.mxu0 0
          %1260 = vmatpush1.bf16.xpose.msra.mxu0 0
          %1261 = vmatprep.subr.bf16.mxu0 0
          %1262 = vmatpush1.bf16.xpose.msra.mxu0 0
          %1263 = vmatprep.subr.bf16.mxu0 0
          %1264 = vmatpush1.bf16.xpose.msra.mxu0 0
          %1265 = vmatprep.subr.bf16.mxu0 0
          %1266 = vmatpush1.bf16.xpose.msra.mxu0 0
          %1267 = vmatprep.subr.bf16.mxu0 0
          %1268 = vmatpush1.bf16.xpose.msra.mxu0 0
          %1269 = vmatprep.subr.bf16.mxu0 0
          %1270 = vmatpush1.bf16.xpose.msra.mxu0 0
          %1271 = vmatprep.subr.bf16.mxu0 0
          %1272 = vmatpush1.bf16.xpose.msra.mxu0 0
          %1273 = vmatprep.subr.bf16.mxu0 0
          %1274 = vmatpush1.bf16.xpose.msra.mxu0 0
          %1275 = vmatprep.subr.bf16.mxu0 0
          %1276 = vmatpush1.bf16.xpose.msra.mxu0 0
          %1277 = vmatprep.subr.bf16.mxu0 0
          %1278 = vmatpush1.bf16.xpose.msra.mxu0 0
          %1279 = vmatprep.mubr.bf16.mxu0 0
          %1280 = vmatmul.mubr.bf16.gmra.mrb[0].mxu0 %v1242
          %v1281 = vpop.f32.mrb[0].mxu0
          %v1282 = vadd.f32 0.0, %v1281
          %v1283 = vpop.f32.mrb[0].mxu0
          %v1284 = vpop.f32.mrb[0].mxu0
          %v1285 = vpop.f32.mrb[0].mxu0
          %1286 = vdwg.mxu0
          %v1287 = vsel %vm1136, %v1282, -1e+30
          %v1288 = vsel %vm1208, %v1287, -inf
          %1289 = vmax.xlane.f32.xlu0 %v1288
          %v1290 = vpop.xlane.xlu0 %1289
          %v1291 = vsub.f32 %v1287, %v1290
          %v1292 = vmul.f32 %v1291, 1.442695
          %v1293 = vpow.pop %v1292
          %v1294 = vsel %vm1208, %v1293, 0.0
          %1295 = vadd.xlane.f32.xlu0 %v1294
          %v1296 = vpop.xlane.xlu0 %1295
          %v1297 = vpack.c.bf16 %v1293, %v1293
          %s1298 = smul.addr %s1140, 4
          %s1299 = scalar_lea.vmem [#allocation3], %s1298
          %v1300 = vld [vmem:[%s1299] sm:$0xf]
          %v1302 = vsel %vm1208, %v1297, 0
          %vm1304 = vcmask 1043456
          %v1306 = vsel %vm1304, %v1300, 0
          %1308 = vmatprep.subr.bf16.mxu0 0
          %1309 = vmatpush1.bf16.msra.mxu0 %v1306
          %1310 = vmatprep.subr.bf16.mxu0 0
          %1311 = vmatpush1.bf16.msra.mxu0 0
          %1312 = vmatprep.subr.bf16.mxu0 0
          %1313 = vmatpush1.bf16.msra.mxu0 0
          %1314 = vmatprep.subr.bf16.mxu0 0
          %1315 = vmatpush1.bf16.msra.mxu0 0
          %1316 = vmatprep.subr.bf16.mxu0 0
          %1317 = vmatpush1.bf16.msra.mxu0 0
          %1318 = vmatprep.subr.bf16.mxu0 0
          %1319 = vmatpush1.bf16.msra.mxu0 0
          %1320 = vmatprep.subr.bf16.mxu0 0
          %1321 = vmatpush1.bf16.msra.mxu0 0
          %1322 = vmatprep.subr.bf16.mxu0 0
          %1323 = vmatpush1.bf16.msra.mxu0 0
          %1324 = vmatprep.subr.bf16.mxu0 0
          %1325 = vmatpush1.bf16.msra.mxu0 0
          %1326 = vmatprep.subr.bf16.mxu0 0
          %1327 = vmatpush1.bf16.msra.mxu0 0
          %1328 = vmatprep.subr.bf16.mxu0 0
          %1329 = vmatpush1.bf16.msra.mxu0 0
          %1330 = vmatprep.subr.bf16.mxu0 0
          %1331 = vmatpush1.bf16.msra.mxu0 0
          %1332 = vmatprep.subr.bf16.mxu0 0
          %1333 = vmatpush1.bf16.msra.mxu0 0
          %1334 = vmatprep.subr.bf16.mxu0 0
          %1335 = vmatpush1.bf16.msra.mxu0 0
          %1336 = vmatprep.subr.bf16.mxu0 0
          %1337 = vmatpush1.bf16.msra.mxu0 0
          %1338 = vmatprep.subr.bf16.mxu0 0
          %1339 = vmatpush1.bf16.msra.mxu0 0
          %1340 = vmatprep.mubr.bf16.mxu0 0
          %1341 = vmatmul.mubr.bf16.gmra.mrb[0].mxu0 %v1302
          %v1342 = vpop.f32.mrb[0].mxu0
          %v1343 = vadd.f32 0.0, %v1342
          %v1344 = vpop.f32.mrb[0].mxu0
          %v1345 = vpop.f32.mrb[0].mxu0
          %v1346 = vpop.f32.mrb[0].mxu0
          %1347 = vdwg.mxu0
          %v1348 = vrcp.pop %v1296
          %v1349 = vmul.f32 %v1343, %v1348
          %v1350 = vpack.c.bf16 %v1349, %v1349
          %s1351 = smul.addr %s1140, 4
          %s1352 = scalar_lea.vmem [#allocation22], %s1351
          %v1353 = vld [vmem:[%s1352] sm:$0xf]
          %v1355 = vsel %vm1208, %v1350, 0
          %v1358 = vsel %vm1304, %v1353, 0
          %1360 = vmatprep.subr.bf16.mxu0 0
          %1361 = vmatpush1.bf16.msra.mxu0 %v1358
          %1362 = vmatprep.subr.bf16.mxu0 0
          %1363 = vmatpush1.bf16.msra.mxu0 0
          %1364 = vmatprep.subr.bf16.mxu0 0
          %1365 = vmatpush1.bf16.msra.mxu0 0
          %1366 = vmatprep.subr.bf16.mxu0 0
          %1367 = vmatpush1.bf16.msra.mxu0 0
          %1368 = vmatprep.subr.bf16.mxu0 0
          %1369 = vmatpush1.bf16.msra.mxu0 0
          %1370 = vmatprep.subr.bf16.mxu0 0
          %1371 = vmatpush1.bf16.msra.mxu0 0
          %1372 = vmatprep.subr.bf16.mxu0 0
          %1373 = vmatpush1.bf16.msra.mxu0 0
          %1374 = vmatprep.subr.bf16.mxu0 0
          %1375 = vmatpush1.bf16.msra.mxu0 0
          %1376 = vmatprep.subr.bf16.mxu0 0
          %1377 = vmatpush1.bf16.msra.mxu0 0
          %1378 = vmatprep.subr.bf16.mxu0 0
          %1379 = vmatpush1.bf16.msra.mxu0 0
          %1380 = vmatprep.subr.bf16.mxu0 0
          %1381 = vmatpush1.bf16.msra.mxu0 0
          %1382 = vmatprep.subr.bf16.mxu0 0
          %1383 = vmatpush1.bf16.msra.mxu0 0
          %1384 = vmatprep.subr.bf16.mxu0 0
          %1385 = vmatpush1.bf16.msra.mxu0 0
          %1386 = vmatprep.subr.bf16.mxu0 0
          %1387 = vmatpush1.bf16.msra.mxu0 0
          %1388 = vmatprep.subr.bf16.mxu0 0
          %1389 = vmatpush1.bf16.msra.mxu0 0
          %1390 = vmatprep.subr.bf16.mxu0 0
          %1391 = vmatpush1.bf16.msra.mxu0 0
          %1392 = vmatprep.mubr.bf16.mxu0 0
          %1393 = vmatmul.mubr.bf16.gmra.mrb[0].mxu0 %v1355
          %v1394 = vpop.f32.mrb[0].mxu0
          %v1395 = vadd.f32 0.0, %v1394
          %v1396 = vpop.f32.mrb[0].mxu0
          %v1397 = vpop.f32.mrb[0].mxu0
          %v1398 = vpop.f32.mrb[0].mxu0
          %1399 = vdwg.mxu0
          %v1400 = vadd.f32 %v1145, %v1395
        $region188: #{tpu_custom_call.1} parent=95 // loop_footer
          %s1144 = sadd.s32 1, %s1140
        $region189: #{tpu_custom_call.1} parent=95 // loop_footer_branch
          %1139 = sbr.rel target = $region185
        $region190: #{tpu_custom_call.1} parent=95 // loop_exit
          _
        %v1401 = vadd.f32 %v1102, %v1145
        %v1402 = vld [vmem:[#allocation24] sm:$0x1]
        %v1404 = vlaneseq
        %v1405 = vshrl.u32 %v1404, 7
        %v1406 = vsub.s32 0, %v1405
        %v1407 = vrot.slane %v1402, %v1406
        %v1409 = vadd.f32 %v1401, %v1407
        %v1410 = vld [vmem:[#allocation25] sm:$0x1]
        %v1411 = vld [vmem:[#allocation27] sm:$0x1]
        %v1412 = vsel %vm1105, %v1409, 0.0
        %1413 = vadd.xlane.f32.xlu0 %v1412
        %v1414 = vpop.xlane.xlu0 %1413
        %v1415 = vmul.f32 %v1414, %v1109
        %v1416 = vsub.f32 %v1409, %v1415
        %v1417 = vmul.f32 %v1416, %v1416
        %v1418 = vsel %vm1105, %v1417, 0.0
        %1419 = vadd.xlane.f32.xlu0 %v1418
        %v1420 = vpop.xlane.xlu0 %1419
        %v1421 = vmul.f32 %v1420, %v1109
        %v1422 = vadd.f32 %v1421, 1e-05
        %v1423 = vrsqrt.pop %v1422
        %v1424 = vmul.f32 %v1416, %v1423
        %v1426 = vlaneseq
        %v1427 = vshrl.u32 %v1426, 7
        %v1428 = vsub.s32 0, %v1427
        %v1429 = vrot.slane %v1410, %v1428
        %v1431 = vmul.f32 %v1424, %v1429
        %v1433 = vlaneseq
        %v1434 = vshrl.u32 %v1433, 7
        %v1435 = vsub.s32 0, %v1434
        %v1436 = vrot.slane %v1411, %v1435
        %v1438 = vadd.f32 %v1431, %v1436
        %v1439 = vpack.c.bf16 %v1438, %v1438
        %v1440 = vld [vmem:[#allocation28] sm:$0xf]
        %v1441 = vld [vmem:[#allocation28 + $0x4] sm:$0xf]
        %v1442 = vld [vmem:[#allocation28 + $0x8] sm:$0xf]
        %v1443 = vld [vmem:[#allocation28 + $0xc] sm:$0xf]
        %v1444 = vld [vmem:[#allocation30] sm:$0x1]
        %v1446 = vlaneseq
        %v1447 = vshrl.u32 %v1446, 7
        %v1448 = vsub.s32 0, %v1447
        %v1449 = vrot.slane %v1444, %v1448
        %v1455 = vunpack.c.l.b16 %v1440
        %v1456 = vunpack.c.l.b16 %v1441
        %v1457 = vunpack.c.l.b16 %v1442
        %v1458 = vunpack.c.l.b16 %v1443
        %v1459 = vpack.c.b16 %v1456, %v1455
        %v1460 = vpack.c.b16 %v1458, %v1457
        %v1464 = vsel %vm1105, %v1439, 0
        %1466 = vmatprep.subr.bf16.mxu0 0
        %1467 = vmatpush1.bf16.msra.mxu0 %v1459
        %1468 = vmatprep.subr.bf16.mxu0 0
        %1469 = vmatpush1.bf16.msra.mxu0 %v1460
        %1470 = vmatprep.subr.bf16.mxu0 0
        %1471 = vmatpush1.bf16.msra.mxu0 0
        %1472 = vmatprep.subr.bf16.mxu0 0
        %1473 = vmatpush1.bf16.msra.mxu0 0
        %1474 = vmatprep.subr.bf16.mxu0 0
        %1475 = vmatpush1.bf16.msra.mxu0 0
        %1476 = vmatprep.subr.bf16.mxu0 0
        %1477 = vmatpush1.bf16.msra.mxu0 0
        %1478 = vmatprep.subr.bf16.mxu0 0
        %1479 = vmatpush1.bf16.msra.mxu0 0
        %1480 = vmatprep.subr.bf16.mxu0 0
        %1481 = vmatpush1.bf16.msra.mxu0 0
        %1482 = vmatprep.subr.bf16.mxu0 0
        %1483 = vmatpush1.bf16.msra.mxu0 0
        %1484 = vmatprep.subr.bf16.mxu0 0
        %1485 = vmatpush1.bf16.msra.mxu0 0
        %1486 = vmatprep.subr.bf16.mxu0 0
        %1487 = vmatpush1.bf16.msra.mxu0 0
        %1488 = vmatprep.subr.bf16.mxu0 0
        %1489 = vmatpush1.bf16.msra.mxu0 0
        %1490 = vmatprep.subr.bf16.mxu0 0
        %1491 = vmatpush1.bf16.msra.mxu0 0
        %1492 = vmatprep.subr.bf16.mxu0 0
        %1493 = vmatpush1.bf16.msra.mxu0 0
        %1494 = vmatprep.subr.bf16.mxu0 0
        %1495 = vmatpush1.bf16.msra.mxu0 0
        %1496 = vmatprep.subr.bf16.mxu0 0
        %1497 = vmatpush1.bf16.msra.mxu0 0
        %1498 = vmatprep.mubr.bf16.mxu0 0
        %1499 = vmatmul.mubr.bf16.gmra.mrb[0].mxu0 %v1464
        %v1500 = vpop.f32.mrb[0].mxu0
        %v1501 = vadd.f32 %v1449, %v1500
        %v1502 = vpop.f32.mrb[0].mxu0
        %v1503 = vpop.f32.mrb[0].mxu0
        %v1504 = vpop.f32.mrb[0].mxu0
        %1505 = vdwg.mxu0
        %v1506 = vmul.f32 %v1501, 0.5
        %v1507 = vmul.f32 %v1501, 0.70710677
        %v1508 = verf.f32.pop %v1507
        %v1509 = vadd.f32 %v1508, 1.0
        %v1510 = vmul.f32 %v1506, %v1509
        %v1511 = vpack.c.bf16 %v1510, %v1510
        %v1512 = vld [vmem:[#allocation31] sm:$0xf]
        %v1513 = vld [vmem:[#allocation31 + $0x4] sm:$0xf]
        %v1514 = vld [vmem:[#allocation31 + $0x8] sm:$0xf]
        %v1515 = vld [vmem:[#allocation31 + $0xc] sm:$0xf]
        %v1516 = vld [vmem:[#allocation31 + $0x10] sm:$0xf]
        %v1517 = vld [vmem:[#allocation31 + $0x14] sm:$0xf]
        %v1518 = vld [vmem:[#allocation31 + $0x18] sm:$0xf]
        %v1519 = vld [vmem:[#allocation31 + $0x1c] sm:$0xf]
        %v1520 = vld [vmem:[#allocation31 + $0x20] sm:$0xf]
        %v1521 = vld [vmem:[#allocation31 + $0x24] sm:$0xf]
        %v1522 = vld [vmem:[#allocation31 + $0x28] sm:$0xf]
        %v1523 = vld [vmem:[#allocation31 + $0x2c] sm:$0xf]
        %v1524 = vld [vmem:[#allocation31 + $0x30] sm:$0xf]
        %v1525 = vld [vmem:[#allocation31 + $0x34] sm:$0xf]
        %v1526 = vld [vmem:[#allocation31 + $0x38] sm:$0xf]
        %v1527 = vld [vmem:[#allocation31 + $0x3c] sm:$0xf]
        %v1544 = vunpack.c.l.b16 %v1512
        %v1545 = vunpack.c.l.b16 %v1513
        %v1546 = vunpack.c.l.b16 %v1514
        %v1547 = vunpack.c.l.b16 %v1515
        %v1548 = vunpack.c.l.b16 %v1516
        %v1549 = vunpack.c.l.b16 %v1517
        %v1550 = vunpack.c.l.b16 %v1518
        %v1551 = vunpack.c.l.b16 %v1519
        %v1552 = vunpack.c.l.b16 %v1520
        %v1553 = vunpack.c.l.b16 %v1521
        %v1554 = vunpack.c.l.b16 %v1522
        %v1555 = vunpack.c.l.b16 %v1523
        %v1556 = vunpack.c.l.b16 %v1524
        %v1557 = vunpack.c.l.b16 %v1525
        %v1558 = vunpack.c.l.b16 %v1526
        %v1559 = vunpack.c.l.b16 %v1527
        %v1560 = vpack.c.b16 %v1545, %v1544
        %v1561 = vpack.c.b16 %v1547, %v1546
        %v1562 = vpack.c.b16 %v1549, %v1548
        %v1563 = vpack.c.b16 %v1551, %v1550
        %v1564 = vpack.c.b16 %v1553, %v1552
        %v1565 = vpack.c.b16 %v1555, %v1554
        %v1566 = vpack.c.b16 %v1557, %v1556
        %v1567 = vpack.c.b16 %v1559, %v1558
        %1576 = vmatprep.subr.bf16.mxu0 0
        %1577 = vmatpush1.bf16.msra.mxu0 %v1560
        %1578 = vmatprep.subr.bf16.mxu0 0
        %1579 = vmatpush1.bf16.msra.mxu0 %v1561
        %1580 = vmatprep.subr.bf16.mxu0 0
        %1581 = vmatpush1.bf16.msra.mxu0 %v1562
        %1582 = vmatprep.subr.bf16.mxu0 0
        %1583 = vmatpush1.bf16.msra.mxu0 %v1563
        %1584 = vmatprep.subr.bf16.mxu0 0
        %1585 = vmatpush1.bf16.msra.mxu0 %v1564
        %1586 = vmatprep.subr.bf16.mxu0 0
        %1587 = vmatpush1.bf16.msra.mxu0 %v1565
        %1588 = vmatprep.subr.bf16.mxu0 0
        %1589 = vmatpush1.bf16.msra.mxu0 %v1566
        %1590 = vmatprep.subr.bf16.mxu0 0
        %1591 = vmatpush1.bf16.msra.mxu0 %v1567
        %1592 = vmatprep.subr.bf16.mxu0 0
        %1593 = vmatpush1.bf16.msra.mxu0 0
        %1594 = vmatprep.subr.bf16.mxu0 0
        %1595 = vmatpush1.bf16.msra.mxu0 0
        %1596 = vmatprep.subr.bf16.mxu0 0
        %1597 = vmatpush1.bf16.msra.mxu0 0
        %1598 = vmatprep.subr.bf16.mxu0 0
        %1599 = vmatpush1.bf16.msra.mxu0 0
        %1600 = vmatprep.subr.bf16.mxu0 0
        %1601 = vmatpush1.bf16.msra.mxu0 0
        %1602 = vmatprep.subr.bf16.mxu0 0
        %1603 = vmatpush1.bf16.msra.mxu0 0
        %1604 = vmatprep.subr.bf16.mxu0 0
        %1605 = vmatpush1.bf16.msra.mxu0 0
        %1606 = vmatprep.subr.bf16.mxu0 0
        %1607 = vmatpush1.bf16.msra.mxu0 0
        %1608 = vmatprep.mubr.bf16.mxu0 0
        %1609 = vmatmul.mubr.bf16.gmra.mrb[0].mxu0 %v1511
        %v1610 = vpop.f32.mrb[0].mxu0
        %v1611 = vadd.f32 0.0, %v1610
        %v1612 = vpop.f32.mrb[0].mxu0
        %v1613 = vpop.f32.mrb[0].mxu0
        %v1614 = vpop.f32.mrb[0].mxu0
        %1615 = vdwg.mxu0
        %v1616 = vadd.f32 %v1409, %v1611
        %v1617 = vld [vmem:[#allocation33] sm:$0x1]
        %v1619 = vlaneseq
        %v1620 = vshrl.u32 %v1619, 7
        %v1621 = vsub.s32 0, %v1620
        %v1622 = vrot.slane %v1617, %v1621
        %v1624 = vadd.f32 %v1616, %v1622
        %1625 = vst.msk [vmem:[%s895] sm:$0xff] %vm1105, %v1624
        %s1626 = sand.u32 %s480, 1
        %s1627 = scalar_lea.sflag [#allocation6], %s1626
        %s1628 = sand.u32 %s480, 1
        %s1629 = smul.addr %s1628, 8
        %s1630 = scalar_lea.vmem [#allocation34], %s1629
        // Predicated region
        $region191: #{tpu_custom_call.1} parent=95 // pred_check
          %p1631 = pneg %p490
        $region192: #{tpu_custom_call.1} parent=95 // pred_check_branch
          %1633 = sbr.rel (%p1631) target = $region194
        $region193: #{tpu_custom_call.1} parent=95 // pred_region
          %s1635 = ssub.s32 128, 128
          %1636 = vsyncadd %s1627, %s1635
          %s1637 = sadd.s32 %s52, %s51
          %s1638 = smul.addr %s1637, 128
          %s1639 = scalar_lea.hbm %s19, %s1638
          %s1641 = sshll.u32 %s1630, 4
          %s1642 = int_to_ptr.vmem [resolvable:$true] %s1641
          %1644 = dma.vmem_to_hbm [thread:$0]  %s1642, 128, %s1639, %s1627
        $region194: #{tpu_custom_call.1} parent=95 // pred_fallthru
          _
      $region96: #{tpu_custom_call.1} parent=5 // pred_fallthru
        _
      %p1645 = scmp.le.s32.totalorder 2, %s42
      // Predicated region
      $region195: #{tpu_custom_call.1} parent=5 // pred_check
        %p1646 = pneg %p1645
      $region196: #{tpu_custom_call.1} parent=5 // pred_check_branch
        %1648 = sbr.rel (%p1646) target = $region198
      $region197: #{tpu_custom_call.1} parent=5 // pred_region
        %s1649 = ssub.s32 %s42, 2
        // Predicated region
        $region199: #{tpu_custom_call.1} parent=197 // pred_check
          %p1650 = pneg %p496
        $region200: #{tpu_custom_call.1} parent=197 // pred_check_branch
          %1652 = sbr.rel (%p1650) target = $region202
        $region201: #{tpu_custom_call.1} parent=197 // pred_region
          %s1653 = sand.u32 %s481, 1
          %s1654 = scalar_lea.sflag [#allocation6], %s1653
          %s1655 = sand.u32 %s481, 1
          %s1656 = smul.addr %s1655, 8
          %s1657 = scalar_lea.vmem [#allocation34], %s1656
          %1658 = dma.done %s1654, 128
        $region202: #{tpu_custom_call.1} parent=197 // pred_fallthru
          _
      $region198: #{tpu_custom_call.1} parent=5 // pred_fallthru
        _
    $region6: #{tpu_custom_call.1} parent=1 // loop_footer
      %s46 = sadd.s32 1, %s42
    $region7: #{tpu_custom_call.1} parent=1 // loop_footer_branch
      %41 = sbr.rel target = $region3
    $region8: #{tpu_custom_call.1} parent=1 // loop_exit
      _
    %1659 = vsyncpa [#allocation5], 1
    %s1660 = scalar_lea.sflag [#allocation5], 1
    %1661 = vsyncpa %s1660, 1
    %1662 = vsyncpa [#allocation8], 1
    %s1663 = scalar_lea.sflag [#allocation8], 1
    %1664 = vsyncpa %s1663, 1
    %1665 = vsyncpa [#allocation11], 1
    %1666 = vsyncpa [#allocation14], 1
    %1667 = vsyncpa [#allocation17], 1
    %1668 = vsyncpa [#allocation20], 1
    %1669 = vsyncpa [#allocation23], 1
    %1670 = vsyncpa [#allocation26], 1
    %1671 = vsyncpa [#allocation29], 1
    %1672 = vsyncpa [#allocation32], 1
    %1673 = vsyncpa [#allocation6], 1
    %s1674 = scalar_lea.sflag [#allocation6], 1
    %1675 = vsyncpa %s1674, 1

</llo_original>
